<compile_context>
chip_gen: v5e
topology: v5e:2x2
jax: 0.10.0
libtpu: 0.0.40
codegen_flags: <defaults>
</compile_context>

<pallas_src>
import functools

import jax
import jax.numpy as jnp
from jax.experimental import pallas as pl
from jax.experimental.pallas import tpu as pltpu


def _round_up(v, m):
    return ((v + m - 1) // m) * m


def local_op_kernel(x_ref, w1_ref, b1_ref, w2_ref, b2_ref, o_ref):
    # x_ref : (s, d, GT) bf16   -- GT groups on the lane axis
    # w1_ref: (C, d)     bf16   (conv1 weight, BN1 scale folded)
    # w2_ref: (C, C)     bf16   (conv2 weight, BN2 scale folded)
    # b1/b2 : (C, 1)     f32    (folded BN biases)
    # o_ref : (C, GT)    f32    (max over s, lane-dense)
    s = x_ref.shape[0]
    w1 = w1_ref[...]
    w2 = w2_ref[...]
    b1 = b1_ref[...]
    b2 = b2_ref[...]
    m = None
    # Small fixed spatial extent -> fully unrolled Python loop (LLO sees everything).
    for i in range(s):
        xs = x_ref[i]                                                   # (d, GT) bf16
        h1 = jnp.dot(w1, xs, preferred_element_type=jnp.float32)        # (C, GT) f32
        h1 = jnp.maximum(h1 + b1, 0.0).astype(w2.dtype)                 # -> bf16
        h2 = jnp.dot(w2, h1, preferred_element_type=jnp.float32)        # (C, GT) f32
        h2 = jnp.maximum(h2 + b2, 0.0)
        m = h2 if m is None else jnp.maximum(m, h2)                     # running max over s
    o_ref[...] = m


@functools.partial(jax.jit, static_argnames=("eps", "group_tile"))
def local_op(x, w1, w2, bn1_params, bn2_params, eps=1e-5, group_tile=2048):
    """x: (b, n, s, d) float32.  Returns (b, C, n) matching the PyTorch module (eval BN)."""
    b, n, s, d = x.shape
    C = w1.shape[0]
    G = b * n

    # Fold eval-mode BatchNorm1d into per-output-channel scale (merged into the conv
    # weight) plus a bias vector.
    g1, beta1, mean1, var1 = bn1_params
    g2, beta2, mean2, var2 = bn2_params
    scale1 = g1 / jnp.sqrt(var1 + eps)
    bias1 = beta1 - mean1 * scale1
    scale2 = g2 / jnp.sqrt(var2 + eps)
    bias2 = beta2 - mean2 * scale2

    # Channel-major weights (C, d) / (C, C) with BN scale folded, bf16 feeds the MXU
    # directly (accumulation stays f32).
    w1s = (w1 * scale1[:, None]).astype(jnp.bfloat16)                   # (C, d)
    w2s = (w2 * scale2[:, None]).astype(jnp.bfloat16)                   # (C, C)
    b1 = bias1.reshape(C, 1).astype(jnp.float32)
    b2 = bias2.reshape(C, 1).astype(jnp.float32)

    # Group-tile selection:
    #  - GT is forced to a multiple of 128 (lane-dense output store, (8,128) rule),
    #  - >= 2 grid steps whenever possible (v7x megacore),
    #  - GT shrunk toward ceil(G/steps) to minimize tail-padding waste.
    group_tile = max(128, _round_up(int(group_tile), 128))
    G128 = _round_up(G, 128)
    GT = min(group_tile, G128)
    num_steps = -(-G128 // GT)
    if num_steps < 2 and G128 >= 256:
        num_steps = 2
    GT = _round_up(-(-G128 // num_steps), 128)
    G_pad = GT * num_steps

    # (b, n, s, d) -> (s, d, G): groups on the minor (lane) axis; the transpose fuses
    # with the f32->bf16 cast in XLA, and bf16 halves input HBM traffic.
    x_sdg = jnp.transpose(x.reshape(G, s, d).astype(jnp.bfloat16), (1, 2, 0))
    if G_pad != G:
        # Zero-padded groups produce relu(bias) garbage columns; sliced off below.
        x_sdg = jnp.pad(x_sdg, ((0, 0), (0, 0), (0, G_pad - G)))

    out_cg = pl.pallas_call(
        local_op_kernel,
        out_shape=jax.ShapeDtypeStruct((C, G_pad), jnp.float32),
        grid_spec=pltpu.PrefetchScalarGridSpec(
            num_scalar_prefetch=0,
            grid=(num_steps,),
            in_specs=[
                pl.BlockSpec((s, d, GT), lambda g: (0, 0, g)),   # GT-group point tile
                pl.BlockSpec((C, d), lambda g: (0, 0)),          # W1 * scale1 (resident)
                pl.BlockSpec((C, 1), lambda g: (0, 0)),          # bn1 bias
                pl.BlockSpec((C, C), lambda g: (0, 0)),          # W2 * scale2 (resident)
                pl.BlockSpec((C, 1), lambda g: (0, 0)),          # bn2 bias
            ],
            out_specs=pl.BlockSpec((C, GT), lambda g: (0, g)),   # lane-dense (C, GT) tile
        ),
        compiler_params=pltpu.CompilerParams(
            dimension_semantics=("parallel",),                   # megacore-shardable
            vmem_limit_bytes=32 * 1024 * 1024,                   # safe on v5e/v6e/v7x
        ),
    )(x_sdg, w1s, b1, w2s, b2)

    # (C, G_pad) -> drop padded groups -> (C, b, n) -> (b, C, n)
    out_cg = out_cg[:, :G]
    return jnp.transpose(out_cg.reshape(C, b, n), (1, 0, 2))


def _reference_f32(x, w1, w2, bn1_params, bn2_params, eps=1e-5):
    """Pure f32 PyTorch-equivalent reference (no bf16 quantization)."""
    b, n, s, d = x.shape
    C = w1.shape[0]
    g1, beta1, mean1, var1 = bn1_params
    g2, beta2, mean2, var2 = bn2_params
    xg = x.reshape(b * n, s, d)
    h1 = jnp.einsum("gsd,cd->gsc", xg, w1)
    h1 = jnp.maximum((h1 - mean1) / jnp.sqrt(var1 + eps) * g1 + beta1, 0.0)
    h2 = jnp.einsum("gsc,kc->gsk", h1, w2)
    h2 = jnp.maximum((h2 - mean2) / jnp.sqrt(var2 + eps) * g2 + beta2, 0.0)
    out = jnp.max(h2, axis=1)                                    # (G, C)
    return jnp.transpose(out.reshape(b, n, C), (0, 2, 1))


def _reference_bf16(x, w1, w2, bn1_params, bn2_params, eps=1e-5):
    """Reference matching the kernel's bf16 quantization points (f32 accumulation)."""
    b, n, s, d = x.shape
    C = w1.shape[0]
    g1, beta1, mean1, var1 = bn1_params
    g2, beta2, mean2, var2 = bn2_params
    scale1 = g1 / jnp.sqrt(var1 + eps)
    bias1 = beta1 - mean1 * scale1
    scale2 = g2 / jnp.sqrt(var2 + eps)
    bias2 = beta2 - mean2 * scale2
    w1s = (w1 * scale1[:, None]).astype(jnp.bfloat16)
    w2s = (w2 * scale2[:, None]).astype(jnp.bfloat16)
    xg = x.reshape(b * n, s, d).astype(jnp.bfloat16)
    h1 = jnp.einsum("gsd,cd->gsc", xg, w1s, preferred_element_type=jnp.float32)
    h1 = jnp.maximum(h1 + bias1, 0.0).astype(jnp.bfloat16)
    h2 = jnp.einsum("gsc,kc->gsk", h1, w2s, preferred_element_type=jnp.float32)
    h2 = jnp.maximum(h2 + bias2, 0.0)
    out = jnp.max(h2, axis=1)
    return jnp.transpose(out.reshape(b, n, C), (0, 2, 1))


def _make_params(key, in_channels, out_channels):
    kw1, kw2, kg1, kb1, km1, kv1, kg2, kb2, km2, kv2 = jax.random.split(key, 10)
    w1 = jax.random.normal(kw1, (out_channels, in_channels), dtype=jnp.float32) * 0.2
    w2 = jax.random.normal(kw2, (out_channels, out_channels), dtype=jnp.float32) * 0.2
    bn1 = (
        1.0 + 0.1 * jax.random.normal(kg1, (out_channels,), jnp.float32),     # gamma
        0.1 * jax.random.normal(kb1, (out_channels,), jnp.float32),           # beta
        0.1 * jax.random.normal(km1, (out_channels,), jnp.float32),           # running mean
        jnp.abs(jax.random.normal(kv1, (out_channels,), jnp.float32)) + 0.5,  # running var
    )
    bn2 = (
        1.0 + 0.1 * jax.random.normal(kg2, (out_channels,), jnp.float32),
        0.1 * jax.random.normal(kb2, (out_channels,), jnp.float32),
        0.1 * jax.random.normal(km2, (out_channels,), jnp.float32),
        jnp.abs(jax.random.normal(kv2, (out_channels,), jnp.float32)) + 0.5,
    )
    return w1, w2, bn1, bn2


def _check(b, n, s, d, out_channels, seed):
    key = jax.random.PRNGKey(seed)
    kx, kp = jax.random.split(key)
    x = jax.random.normal(kx, (b, n, s, d), dtype=jnp.float32)
    w1, w2, bn1, bn2 = _make_params(kp, d, out_channels)

    out = jax.block_until_ready(local_op(x, w1, w2, bn1, bn2))
    assert out.shape == (b, out_channels, n), out.shape

    # Tight check vs a reference using the same bf16 quantization points.
    ref_q = _reference_bf16(x, w1, w2, bn1, bn2)
    assert jnp.allclose(out, ref_q, atol=2e-3, rtol=2e-3), float(jnp.max(jnp.abs(out - ref_q)))

    # Loose check vs the pure f32 PyTorch-equivalent reference.
    ref_f = _reference_f32(x, w1, w2, bn1, bn2)
    assert jnp.allclose(out, ref_f, atol=5e-2, rtol=5e-2), float(jnp.max(jnp.abs(out - ref_f)))


if __name__ == "__main__":
    # TODO(synk): training-mode BatchNorm (batch statistics) is not implemented; the
    # kernel folds eval-mode running statistics, matching module.eval() semantics.
    # Small shapes consistent with the module: x is (b, n, s, d), in_channels = d.
    _check(b=2, n=8, s=16, d=4, out_channels=32, seed=0)      # single grid step
    _check(b=2, n=200, s=16, d=4, out_channels=32, seed=1)    # 2 grid steps + tail padding
    print("KERNEL_OK")
</pallas_src>

<mosaic_0001>
module attributes {stable_mosaic.version = 11 : i64} {
  func.func @local_op_kernel(%arg0: i32, %arg1: memref<16x4x128xbf16, #tpu.memory_space<vmem>>, %arg2: memref<32x4xbf16, #tpu.memory_space<vmem>>, %arg3: memref<32x1xf32, #tpu.memory_space<vmem>>, %arg4: memref<32x32xbf16, #tpu.memory_space<vmem>>, %arg5: memref<32x1xf32, #tpu.memory_space<vmem>>, %arg6: memref<32x128xf32, #tpu.memory_space<vmem>>) attributes {dimension_semantics = [#tpu.dimension_semantics<parallel>], iteration_bounds = array<i64: 1>, scalar_prefetch = 0 : i64, scratch_operands = 0 : i64, tpu.core_type = #tpu.core_type<tc>, window_params = [{transform_indices = @transform_0, window_bounds = array<i64: 16, 4, 128>}, {pipeline_mode = #tpu.pipeline_mode<synchronous>, transform_indices = @transform_1, window_bounds = array<i64: 32, 4>}, {pipeline_mode = #tpu.pipeline_mode<synchronous>, transform_indices = @transform_2, window_bounds = array<i64: 32, 1>}, {pipeline_mode = #tpu.pipeline_mode<synchronous>, transform_indices = @transform_3, window_bounds = array<i64: 32, 32>}, {pipeline_mode = #tpu.pipeline_mode<synchronous>, transform_indices = @transform_4, window_bounds = array<i64: 32, 1>}, {transform_indices = @transform_5, window_bounds = array<i64: 32, 128>}]} {
    %c0 = arith.constant 0 : index
    %c0_0 = arith.constant 0 : index
    %0 = vector.load %arg2[%c0, %c0_0] : memref<32x4xbf16, #tpu.memory_space<vmem>>, vector<32x4xbf16>
    %c0_1 = arith.constant 0 : index
    %c0_2 = arith.constant 0 : index
    %1 = vector.load %arg4[%c0_1, %c0_2] : memref<32x32xbf16, #tpu.memory_space<vmem>>, vector<32x32xbf16>
    %c0_3 = arith.constant 0 : index
    %c0_4 = arith.constant 0 : index
    %2 = vector.load %arg3[%c0_3, %c0_4] : memref<32x1xf32, #tpu.memory_space<vmem>>, vector<32x1xf32>
    %c0_5 = arith.constant 0 : index
    %c0_6 = arith.constant 0 : index
    %3 = vector.load %arg5[%c0_5, %c0_6] : memref<32x1xf32, #tpu.memory_space<vmem>>, vector<32x1xf32>
    %c0_7 = arith.constant 0 : index
    %c0_8 = arith.constant 0 : index
    %c0_9 = arith.constant 0 : index
    %4 = vector.load %arg1[%c0_7, %c0_8, %c0_9] : memref<16x4x128xbf16, #tpu.memory_space<vmem>>, vector<1x4x128xbf16>
    %5 = vector.shape_cast %4 : vector<1x4x128xbf16> to vector<4x128xbf16>
    %cst = arith.constant dense<0.000000e+00> : vector<32x128xf32>
    %6 = tpu.matmul %0, %5, %cst {dimension_numbers = #tpu.dot_dimension_numbers<[1], [0], [0], [1], [0, 0, 1, 1], [], []>} : vector<32x4xbf16>, vector<4x128xbf16>, vector<32x128xf32> -> vector<32x128xf32>
    %7 = vector.broadcast %2 : vector<32x1xf32> to vector<32x128xf32>
    %8 = arith.addf %6, %7 : vector<32x128xf32>
    %cst_10 = arith.constant 0.000000e+00 : f32
    %9 = vector.broadcast %cst_10 : f32 to vector<32x128xf32>
    %10 = arith.maximumf %8, %9 : vector<32x128xf32>
    %11 = arith.truncf %10 : vector<32x128xf32> to vector<32x128xbf16>
    %cst_11 = arith.constant dense<0.000000e+00> : vector<32x128xf32>
    %12 = tpu.matmul %1, %11, %cst_11 {dimension_numbers = #tpu.dot_dimension_numbers<[1], [0], [0], [1], [0, 0, 1, 1], [], []>} : vector<32x32xbf16>, vector<32x128xbf16>, vector<32x128xf32> -> vector<32x128xf32>
    %13 = vector.broadcast %3 : vector<32x1xf32> to vector<32x128xf32>
    %14 = arith.addf %12, %13 : vector<32x128xf32>
    %cst_12 = arith.constant 0.000000e+00 : f32
    %15 = vector.broadcast %cst_12 : f32 to vector<32x128xf32>
    %16 = arith.maximumf %14, %15 : vector<32x128xf32>
    %c1 = arith.constant 1 : index
    %c0_13 = arith.constant 0 : index
    %c0_14 = arith.constant 0 : index
    %17 = vector.load %arg1[%c1, %c0_13, %c0_14] : memref<16x4x128xbf16, #tpu.memory_space<vmem>>, vector<1x4x128xbf16>
    %18 = vector.shape_cast %17 : vector<1x4x128xbf16> to vector<4x128xbf16>
    %cst_15 = arith.constant dense<0.000000e+00> : vector<32x128xf32>
    %19 = tpu.matmul %0, %18, %cst_15 {dimension_numbers = #tpu.dot_dimension_numbers<[1], [0], [0], [1], [0, 0, 1, 1], [], []>} : vector<32x4xbf16>, vector<4x128xbf16>, vector<32x128xf32> -> vector<32x128xf32>
    %20 = vector.broadcast %2 : vector<32x1xf32> to vector<32x128xf32>
    %21 = arith.addf %19, %20 : vector<32x128xf32>
    %cst_16 = arith.constant 0.000000e+00 : f32
    %22 = vector.broadcast %cst_16 : f32 to vector<32x128xf32>
    %23 = arith.maximumf %21, %22 : vector<32x128xf32>
    %24 = arith.truncf %23 : vector<32x128xf32> to vector<32x128xbf16>
    %cst_17 = arith.constant dense<0.000000e+00> : vector<32x128xf32>
    %25 = tpu.matmul %1, %24, %cst_17 {dimension_numbers = #tpu.dot_dimension_numbers<[1], [0], [0], [1], [0, 0, 1, 1], [], []>} : vector<32x32xbf16>, vector<32x128xbf16>, vector<32x128xf32> -> vector<32x128xf32>
    %26 = vector.broadcast %3 : vector<32x1xf32> to vector<32x128xf32>
    %27 = arith.addf %25, %26 : vector<32x128xf32>
    %cst_18 = arith.constant 0.000000e+00 : f32
    %28 = vector.broadcast %cst_18 : f32 to vector<32x128xf32>
    %29 = arith.maximumf %27, %28 : vector<32x128xf32>
    %30 = arith.maximumf %16, %29 : vector<32x128xf32>
    %c2 = arith.constant 2 : index
    %c0_19 = arith.constant 0 : index
    %c0_20 = arith.constant 0 : index
    %31 = vector.load %arg1[%c2, %c0_19, %c0_20] : memref<16x4x128xbf16, #tpu.memory_space<vmem>>, vector<1x4x128xbf16>
    %32 = vector.shape_cast %31 : vector<1x4x128xbf16> to vector<4x128xbf16>
    %cst_21 = arith.constant dense<0.000000e+00> : vector<32x128xf32>
    %33 = tpu.matmul %0, %32, %cst_21 {dimension_numbers = #tpu.dot_dimension_numbers<[1], [0], [0], [1], [0, 0, 1, 1], [], []>} : vector<32x4xbf16>, vector<4x128xbf16>, vector<32x128xf32> -> vector<32x128xf32>
    %34 = vector.broadcast %2 : vector<32x1xf32> to vector<32x128xf32>
    %35 = arith.addf %33, %34 : vector<32x128xf32>
    %cst_22 = arith.constant 0.000000e+00 : f32
    %36 = vector.broadcast %cst_22 : f32 to vector<32x128xf32>
    %37 = arith.maximumf %35, %36 : vector<32x128xf32>
    %38 = arith.truncf %37 : vector<32x128xf32> to vector<32x128xbf16>
    %cst_23 = arith.constant dense<0.000000e+00> : vector<32x128xf32>
    %39 = tpu.matmul %1, %38, %cst_23 {dimension_numbers = #tpu.dot_dimension_numbers<[1], [0], [0], [1], [0, 0, 1, 1], [], []>} : vector<32x32xbf16>, vector<32x128xbf16>, vector<32x128xf32> -> vector<32x128xf32>
    %40 = vector.broadcast %3 : vector<32x1xf32> to vector<32x128xf32>
    %41 = arith.addf %39, %40 : vector<32x128xf32>
    %cst_24 = arith.constant 0.000000e+00 : f32
    %42 = vector.broadcast %cst_24 : f32 to vector<32x128xf32>
    %43 = arith.maximumf %41, %42 : vector<32x128xf32>
    %44 = arith.maximumf %30, %43 : vector<32x128xf32>
    %c3 = arith.constant 3 : index
    %c0_25 = arith.constant 0 : index
    %c0_26 = arith.constant 0 : index
    %45 = vector.load %arg1[%c3, %c0_25, %c0_26] : memref<16x4x128xbf16, #tpu.memory_space<vmem>>, vector<1x4x128xbf16>
    %46 = vector.shape_cast %45 : vector<1x4x128xbf16> to vector<4x128xbf16>
    %cst_27 = arith.constant dense<0.000000e+00> : vector<32x128xf32>
    %47 = tpu.matmul %0, %46, %cst_27 {dimension_numbers = #tpu.dot_dimension_numbers<[1], [0], [0], [1], [0, 0, 1, 1], [], []>} : vector<32x4xbf16>, vector<4x128xbf16>, vector<32x128xf32> -> vector<32x128xf32>
    %48 = vector.broadcast %2 : vector<32x1xf32> to vector<32x128xf32>
    %49 = arith.addf %47, %48 : vector<32x128xf32>
    %cst_28 = arith.constant 0.000000e+00 : f32
    %50 = vector.broadcast %cst_28 : f32 to vector<32x128xf32>
    %51 = arith.maximumf %49, %50 : vector<32x128xf32>
    %52 = arith.truncf %51 : vector<32x128xf32> to vector<32x128xbf16>
    %cst_29 = arith.constant dense<0.000000e+00> : vector<32x128xf32>
    %53 = tpu.matmul %1, %52, %cst_29 {dimension_numbers = #tpu.dot_dimension_numbers<[1], [0], [0], [1], [0, 0, 1, 1], [], []>} : vector<32x32xbf16>, vector<32x128xbf16>, vector<32x128xf32> -> vector<32x128xf32>
    %54 = vector.broadcast %3 : vector<32x1xf32> to vector<32x128xf32>
    %55 = arith.addf %53, %54 : vector<32x128xf32>
    %cst_30 = arith.constant 0.000000e+00 : f32
    %56 = vector.broadcast %cst_30 : f32 to vector<32x128xf32>
    %57 = arith.maximumf %55, %56 : vector<32x128xf32>
    %58 = arith.maximumf %44, %57 : vector<32x128xf32>
    %c4 = arith.constant 4 : index
    %c0_31 = arith.constant 0 : index
    %c0_32 = arith.constant 0 : index
    %59 = vector.load %arg1[%c4, %c0_31, %c0_32] : memref<16x4x128xbf16, #tpu.memory_space<vmem>>, vector<1x4x128xbf16>
    %60 = vector.shape_cast %59 : vector<1x4x128xbf16> to vector<4x128xbf16>
    %cst_33 = arith.constant dense<0.000000e+00> : vector<32x128xf32>
    %61 = tpu.matmul %0, %60, %cst_33 {dimension_numbers = #tpu.dot_dimension_numbers<[1], [0], [0], [1], [0, 0, 1, 1], [], []>} : vector<32x4xbf16>, vector<4x128xbf16>, vector<32x128xf32> -> vector<32x128xf32>
    %62 = vector.broadcast %2 : vector<32x1xf32> to vector<32x128xf32>
    %63 = arith.addf %61, %62 : vector<32x128xf32>
    %cst_34 = arith.constant 0.000000e+00 : f32
    %64 = vector.broadcast %cst_34 : f32 to vector<32x128xf32>
    %65 = arith.maximumf %63, %64 : vector<32x128xf32>
    %66 = arith.truncf %65 : vector<32x128xf32> to vector<32x128xbf16>
    %cst_35 = arith.constant dense<0.000000e+00> : vector<32x128xf32>
    %67 = tpu.matmul %1, %66, %cst_35 {dimension_numbers = #tpu.dot_dimension_numbers<[1], [0], [0], [1], [0, 0, 1, 1], [], []>} : vector<32x32xbf16>, vector<32x128xbf16>, vector<32x128xf32> -> vector<32x128xf32>
    %68 = vector.broadcast %3 : vector<32x1xf32> to vector<32x128xf32>
    %69 = arith.addf %67, %68 : vector<32x128xf32>
    %cst_36 = arith.constant 0.000000e+00 : f32
    %70 = vector.broadcast %cst_36 : f32 to vector<32x128xf32>
    %71 = arith.maximumf %69, %70 : vector<32x128xf32>
    %72 = arith.maximumf %58, %71 : vector<32x128xf32>
    %c5 = arith.constant 5 : index
    %c0_37 = arith.constant 0 : index
    %c0_38 = arith.constant 0 : index
    %73 = vector.load %arg1[%c5, %c0_37, %c0_38] : memref<16x4x128xbf16, #tpu.memory_space<vmem>>, vector<1x4x128xbf16>
    %74 = vector.shape_cast %73 : vector<1x4x128xbf16> to vector<4x128xbf16>
    %cst_39 = arith.constant dense<0.000000e+00> : vector<32x128xf32>
    %75 = tpu.matmul %0, %74, %cst_39 {dimension_numbers = #tpu.dot_dimension_numbers<[1], [0], [0], [1], [0, 0, 1, 1], [], []>} : vector<32x4xbf16>, vector<4x128xbf16>, vector<32x128xf32> -> vector<32x128xf32>
    %76 = vector.broadcast %2 : vector<32x1xf32> to vector<32x128xf32>
    %77 = arith.addf %75, %76 : vector<32x128xf32>
    %cst_40 = arith.constant 0.000000e+00 : f32
    %78 = vector.broadcast %cst_40 : f32 to vector<32x128xf32>
    %79 = arith.maximumf %77, %78 : vector<32x128xf32>
    %80 = arith.truncf %79 : vector<32x128xf32> to vector<32x128xbf16>
    %cst_41 = arith.constant dense<0.000000e+00> : vector<32x128xf32>
    %81 = tpu.matmul %1, %80, %cst_41 {dimension_numbers = #tpu.dot_dimension_numbers<[1], [0], [0], [1], [0, 0, 1, 1], [], []>} : vector<32x32xbf16>, vector<32x128xbf16>, vector<32x128xf32> -> vector<32x128xf32>
    %82 = vector.broadcast %3 : vector<32x1xf32> to vector<32x128xf32>
    %83 = arith.addf %81, %82 : vector<32x128xf32>
    %cst_42 = arith.constant 0.000000e+00 : f32
    %84 = vector.broadcast %cst_42 : f32 to vector<32x128xf32>
    %85 = arith.maximumf %83, %84 : vector<32x128xf32>
    %86 = arith.maximumf %72, %85 : vector<32x128xf32>
    %c6 = arith.constant 6 : index
    %c0_43 = arith.constant 0 : index
    %c0_44 = arith.constant 0 : index
    %87 = vector.load %arg1[%c6, %c0_43, %c0_44] : memref<16x4x128xbf16, #tpu.memory_space<vmem>>, vector<1x4x128xbf16>
    %88 = vector.shape_cast %87 : vector<1x4x128xbf16> to vector<4x128xbf16>
    %cst_45 = arith.constant dense<0.000000e+00> : vector<32x128xf32>
    %89 = tpu.matmul %0, %88, %cst_45 {dimension_numbers = #tpu.dot_dimension_numbers<[1], [0], [0], [1], [0, 0, 1, 1], [], []>} : vector<32x4xbf16>, vector<4x128xbf16>, vector<32x128xf32> -> vector<32x128xf32>
    %90 = vector.broadcast %2 : vector<32x1xf32> to vector<32x128xf32>
    %91 = arith.addf %89, %90 : vector<32x128xf32>
    %cst_46 = arith.constant 0.000000e+00 : f32
    %92 = vector.broadcast %cst_46 : f32 to vector<32x128xf32>
    %93 = arith.maximumf %91, %92 : vector<32x128xf32>
    %94 = arith.truncf %93 : vector<32x128xf32> to vector<32x128xbf16>
    %cst_47 = arith.constant dense<0.000000e+00> : vector<32x128xf32>
    %95 = tpu.matmul %1, %94, %cst_47 {dimension_numbers = #tpu.dot_dimension_numbers<[1], [0], [0], [1], [0, 0, 1, 1], [], []>} : vector<32x32xbf16>, vector<32x128xbf16>, vector<32x128xf32> -> vector<32x128xf32>
    %96 = vector.broadcast %3 : vector<32x1xf32> to vector<32x128xf32>
    %97 = arith.addf %95, %96 : vector<32x128xf32>
    %cst_48 = arith.constant 0.000000e+00 : f32
    %98 = vector.broadcast %cst_48 : f32 to vector<32x128xf32>
    %99 = arith.maximumf %97, %98 : vector<32x128xf32>
    %100 = arith.maximumf %86, %99 : vector<32x128xf32>
    %c7 = arith.constant 7 : index
    %c0_49 = arith.constant 0 : index
    %c0_50 = arith.constant 0 : index
    %101 = vector.load %arg1[%c7, %c0_49, %c0_50] : memref<16x4x128xbf16, #tpu.memory_space<vmem>>, vector<1x4x128xbf16>
    %102 = vector.shape_cast %101 : vector<1x4x128xbf16> to vector<4x128xbf16>
    %cst_51 = arith.constant dense<0.000000e+00> : vector<32x128xf32>
    %103 = tpu.matmul %0, %102, %cst_51 {dimension_numbers = #tpu.dot_dimension_numbers<[1], [0], [0], [1], [0, 0, 1, 1], [], []>} : vector<32x4xbf16>, vector<4x128xbf16>, vector<32x128xf32> -> vector<32x128xf32>
    %104 = vector.broadcast %2 : vector<32x1xf32> to vector<32x128xf32>
    %105 = arith.addf %103, %104 : vector<32x128xf32>
    %cst_52 = arith.constant 0.000000e+00 : f32
    %106 = vector.broadcast %cst_52 : f32 to vector<32x128xf32>
    %107 = arith.maximumf %105, %106 : vector<32x128xf32>
    %108 = arith.truncf %107 : vector<32x128xf32> to vector<32x128xbf16>
    %cst_53 = arith.constant dense<0.000000e+00> : vector<32x128xf32>
    %109 = tpu.matmul %1, %108, %cst_53 {dimension_numbers = #tpu.dot_dimension_numbers<[1], [0], [0], [1], [0, 0, 1, 1], [], []>} : vector<32x32xbf16>, vector<32x128xbf16>, vector<32x128xf32> -> vector<32x128xf32>
    %110 = vector.broadcast %3 : vector<32x1xf32> to vector<32x128xf32>
    %111 = arith.addf %109, %110 : vector<32x128xf32>
    %cst_54 = arith.constant 0.000000e+00 : f32
    %112 = vector.broadcast %cst_54 : f32 to vector<32x128xf32>
    %113 = arith.maximumf %111, %112 : vector<32x128xf32>
    %114 = arith.maximumf %100, %113 : vector<32x128xf32>
    %c8 = arith.constant 8 : index
    %c0_55 = arith.constant 0 : index
    %c0_56 = arith.constant 0 : index
    %115 = vector.load %arg1[%c8, %c0_55, %c0_56] : memref<16x4x128xbf16, #tpu.memory_space<vmem>>, vector<1x4x128xbf16>
    %116 = vector.shape_cast %115 : vector<1x4x128xbf16> to vector<4x128xbf16>
    %cst_57 = arith.constant dense<0.000000e+00> : vector<32x128xf32>
    %117 = tpu.matmul %0, %116, %cst_57 {dimension_numbers = #tpu.dot_dimension_numbers<[1], [0], [0], [1], [0, 0, 1, 1], [], []>} : vector<32x4xbf16>, vector<4x128xbf16>, vector<32x128xf32> -> vector<32x128xf32>
    %118 = vector.broadcast %2 : vector<32x1xf32> to vector<32x128xf32>
    %119 = arith.addf %117, %118 : vector<32x128xf32>
    %cst_58 = arith.constant 0.000000e+00 : f32
    %120 = vector.broadcast %cst_58 : f32 to vector<32x128xf32>
    %121 = arith.maximumf %119, %120 : vector<32x128xf32>
    %122 = arith.truncf %121 : vector<32x128xf32> to vector<32x128xbf16>
    %cst_59 = arith.constant dense<0.000000e+00> : vector<32x128xf32>
    %123 = tpu.matmul %1, %122, %cst_59 {dimension_numbers = #tpu.dot_dimension_numbers<[1], [0], [0], [1], [0, 0, 1, 1], [], []>} : vector<32x32xbf16>, vector<32x128xbf16>, vector<32x128xf32> -> vector<32x128xf32>
    %124 = vector.broadcast %3 : vector<32x1xf32> to vector<32x128xf32>
    %125 = arith.addf %123, %124 : vector<32x128xf32>
    %cst_60 = arith.constant 0.000000e+00 : f32
    %126 = vector.broadcast %cst_60 : f32 to vector<32x128xf32>
    %127 = arith.maximumf %125, %126 : vector<32x128xf32>
    %128 = arith.maximumf %114, %127 : vector<32x128xf32>
    %c9 = arith.constant 9 : index
    %c0_61 = arith.constant 0 : index
    %c0_62 = arith.constant 0 : index
    %129 = vector.load %arg1[%c9, %c0_61, %c0_62] : memref<16x4x128xbf16, #tpu.memory_space<vmem>>, vector<1x4x128xbf16>
    %130 = vector.shape_cast %129 : vector<1x4x128xbf16> to vector<4x128xbf16>
    %cst_63 = arith.constant dense<0.000000e+00> : vector<32x128xf32>
    %131 = tpu.matmul %0, %130, %cst_63 {dimension_numbers = #tpu.dot_dimension_numbers<[1], [0], [0], [1], [0, 0, 1, 1], [], []>} : vector<32x4xbf16>, vector<4x128xbf16>, vector<32x128xf32> -> vector<32x128xf32>
    %132 = vector.broadcast %2 : vector<32x1xf32> to vector<32x128xf32>
    %133 = arith.addf %131, %132 : vector<32x128xf32>
    %cst_64 = arith.constant 0.000000e+00 : f32
    %134 = vector.broadcast %cst_64 : f32 to vector<32x128xf32>
    %135 = arith.maximumf %133, %134 : vector<32x128xf32>
    %136 = arith.truncf %135 : vector<32x128xf32> to vector<32x128xbf16>
    %cst_65 = arith.constant dense<0.000000e+00> : vector<32x128xf32>
    %137 = tpu.matmul %1, %136, %cst_65 {dimension_numbers = #tpu.dot_dimension_numbers<[1], [0], [0], [1], [0, 0, 1, 1], [], []>} : vector<32x32xbf16>, vector<32x128xbf16>, vector<32x128xf32> -> vector<32x128xf32>
    %138 = vector.broadcast %3 : vector<32x1xf32> to vector<32x128xf32>
    %139 = arith.addf %137, %138 : vector<32x128xf32>
    %cst_66 = arith.constant 0.000000e+00 : f32
    %140 = vector.broadcast %cst_66 : f32 to vector<32x128xf32>
    %141 = arith.maximumf %139, %140 : vector<32x128xf32>
    %142 = arith.maximumf %128, %141 : vector<32x128xf32>
    %c10 = arith.constant 10 : index
    %c0_67 = arith.constant 0 : index
    %c0_68 = arith.constant 0 : index
    %143 = vector.load %arg1[%c10, %c0_67, %c0_68] : memref<16x4x128xbf16, #tpu.memory_space<vmem>>, vector<1x4x128xbf16>
    %144 = vector.shape_cast %143 : vector<1x4x128xbf16> to vector<4x128xbf16>
    %cst_69 = arith.constant dense<0.000000e+00> : vector<32x128xf32>
    %145 = tpu.matmul %0, %144, %cst_69 {dimension_numbers = #tpu.dot_dimension_numbers<[1], [0], [0], [1], [0, 0, 1, 1], [], []>} : vector<32x4xbf16>, vector<4x128xbf16>, vector<32x128xf32> -> vector<32x128xf32>
    %146 = vector.broadcast %2 : vector<32x1xf32> to vector<32x128xf32>
    %147 = arith.addf %145, %146 : vector<32x128xf32>
    %cst_70 = arith.constant 0.000000e+00 : f32
    %148 = vector.broadcast %cst_70 : f32 to vector<32x128xf32>
    %149 = arith.maximumf %147, %148 : vector<32x128xf32>
    %150 = arith.truncf %149 : vector<32x128xf32> to vector<32x128xbf16>
    %cst_71 = arith.constant dense<0.000000e+00> : vector<32x128xf32>
    %151 = tpu.matmul %1, %150, %cst_71 {dimension_numbers = #tpu.dot_dimension_numbers<[1], [0], [0], [1], [0, 0, 1, 1], [], []>} : vector<32x32xbf16>, vector<32x128xbf16>, vector<32x128xf32> -> vector<32x128xf32>
    %152 = vector.broadcast %3 : vector<32x1xf32> to vector<32x128xf32>
    %153 = arith.addf %151, %152 : vector<32x128xf32>
    %cst_72 = arith.constant 0.000000e+00 : f32
    %154 = vector.broadcast %cst_72 : f32 to vector<32x128xf32>
    %155 = arith.maximumf %153, %154 : vector<32x128xf32>
    %156 = arith.maximumf %142, %155 : vector<32x128xf32>
    %c11 = arith.constant 11 : index
    %c0_73 = arith.constant 0 : index
    %c0_74 = arith.constant 0 : index
    %157 = vector.load %arg1[%c11, %c0_73, %c0_74] : memref<16x4x128xbf16, #tpu.memory_space<vmem>>, vector<1x4x128xbf16>
    %158 = vector.shape_cast %157 : vector<1x4x128xbf16> to vector<4x128xbf16>
    %cst_75 = arith.constant dense<0.000000e+00> : vector<32x128xf32>
    %159 = tpu.matmul %0, %158, %cst_75 {dimension_numbers = #tpu.dot_dimension_numbers<[1], [0], [0], [1], [0, 0, 1, 1], [], []>} : vector<32x4xbf16>, vector<4x128xbf16>, vector<32x128xf32> -> vector<32x128xf32>
    %160 = vector.broadcast %2 : vector<32x1xf32> to vector<32x128xf32>
    %161 = arith.addf %159, %160 : vector<32x128xf32>
    %cst_76 = arith.constant 0.000000e+00 : f32
    %162 = vector.broadcast %cst_76 : f32 to vector<32x128xf32>
    %163 = arith.maximumf %161, %162 : vector<32x128xf32>
    %164 = arith.truncf %163 : vector<32x128xf32> to vector<32x128xbf16>
    %cst_77 = arith.constant dense<0.000000e+00> : vector<32x128xf32>
    %165 = tpu.matmul %1, %164, %cst_77 {dimension_numbers = #tpu.dot_dimension_numbers<[1], [0], [0], [1], [0, 0, 1, 1], [], []>} : vector<32x32xbf16>, vector<32x128xbf16>, vector<32x128xf32> -> vector<32x128xf32>
    %166 = vector.broadcast %3 : vector<32x1xf32> to vector<32x128xf32>
    %167 = arith.addf %165, %166 : vector<32x128xf32>
    %cst_78 = arith.constant 0.000000e+00 : f32
    %168 = vector.broadcast %cst_78 : f32 to vector<32x128xf32>
    %169 = arith.maximumf %167, %168 : vector<32x128xf32>
    %170 = arith.maximumf %156, %169 : vector<32x128xf32>
    %c12 = arith.constant 12 : index
    %c0_79 = arith.constant 0 : index
    %c0_80 = arith.constant 0 : index
    %171 = vector.load %arg1[%c12, %c0_79, %c0_80] : memref<16x4x128xbf16, #tpu.memory_space<vmem>>, vector<1x4x128xbf16>
    %172 = vector.shape_cast %171 : vector<1x4x128xbf16> to vector<4x128xbf16>
    %cst_81 = arith.constant dense<0.000000e+00> : vector<32x128xf32>
    %173 = tpu.matmul %0, %172, %cst_81 {dimension_numbers = #tpu.dot_dimension_numbers<[1], [0], [0], [1], [0, 0, 1, 1], [], []>} : vector<32x4xbf16>, vector<4x128xbf16>, vector<32x128xf32> -> vector<32x128xf32>
    %174 = vector.broadcast %2 : vector<32x1xf32> to vector<32x128xf32>
    %175 = arith.addf %173, %174 : vector<32x128xf32>
    %cst_82 = arith.constant 0.000000e+00 : f32
    %176 = vector.broadcast %cst_82 : f32 to vector<32x128xf32>
    %177 = arith.maximumf %175, %176 : vector<32x128xf32>
    %178 = arith.truncf %177 : vector<32x128xf32> to vector<32x128xbf16>
    %cst_83 = arith.constant dense<0.000000e+00> : vector<32x128xf32>
    %179 = tpu.matmul %1, %178, %cst_83 {dimension_numbers = #tpu.dot_dimension_numbers<[1], [0], [0], [1], [0, 0, 1, 1], [], []>} : vector<32x32xbf16>, vector<32x128xbf16>, vector<32x128xf32> -> vector<32x128xf32>
    %180 = vector.broadcast %3 : vector<32x1xf32> to vector<32x128xf32>
    %181 = arith.addf %179, %180 : vector<32x128xf32>
    %cst_84 = arith.constant 0.000000e+00 : f32
    %182 = vector.broadcast %cst_84 : f32 to vector<32x128xf32>
    %183 = arith.maximumf %181, %182 : vector<32x128xf32>
    %184 = arith.maximumf %170, %183 : vector<32x128xf32>
    %c13 = arith.constant 13 : index
    %c0_85 = arith.constant 0 : index
    %c0_86 = arith.constant 0 : index
    %185 = vector.load %arg1[%c13, %c0_85, %c0_86] : memref<16x4x128xbf16, #tpu.memory_space<vmem>>, vector<1x4x128xbf16>
    %186 = vector.shape_cast %185 : vector<1x4x128xbf16> to vector<4x128xbf16>
    %cst_87 = arith.constant dense<0.000000e+00> : vector<32x128xf32>
    %187 = tpu.matmul %0, %186, %cst_87 {dimension_numbers = #tpu.dot_dimension_numbers<[1], [0], [0], [1], [0, 0, 1, 1], [], []>} : vector<32x4xbf16>, vector<4x128xbf16>, vector<32x128xf32> -> vector<32x128xf32>
    %188 = vector.broadcast %2 : vector<32x1xf32> to vector<32x128xf32>
    %189 = arith.addf %187, %188 : vector<32x128xf32>
    %cst_88 = arith.constant 0.000000e+00 : f32
    %190 = vector.broadcast %cst_88 : f32 to vector<32x128xf32>
    %191 = arith.maximumf %189, %190 : vector<32x128xf32>
    %192 = arith.truncf %191 : vector<32x128xf32> to vector<32x128xbf16>
    %cst_89 = arith.constant dense<0.000000e+00> : vector<32x128xf32>
    %193 = tpu.matmul %1, %192, %cst_89 {dimension_numbers = #tpu.dot_dimension_numbers<[1], [0], [0], [1], [0, 0, 1, 1], [], []>} : vector<32x32xbf16>, vector<32x128xbf16>, vector<32x128xf32> -> vector<32x128xf32>
    %194 = vector.broadcast %3 : vector<32x1xf32> to vector<32x128xf32>
    %195 = arith.addf %193, %194 : vector<32x128xf32>
    %cst_90 = arith.constant 0.000000e+00 : f32
    %196 = vector.broadcast %cst_90 : f32 to vector<32x128xf32>
    %197 = arith.maximumf %195, %196 : vector<32x128xf32>
    %198 = arith.maximumf %184, %197 : vector<32x128xf32>
    %c14 = arith.constant 14 : index
    %c0_91 = arith.constant 0 : index
    %c0_92 = arith.constant 0 : index
    %199 = vector.load %arg1[%c14, %c0_91, %c0_92] : memref<16x4x128xbf16, #tpu.memory_space<vmem>>, vector<1x4x128xbf16>
    %200 = vector.shape_cast %199 : vector<1x4x128xbf16> to vector<4x128xbf16>
    %cst_93 = arith.constant dense<0.000000e+00> : vector<32x128xf32>
    %201 = tpu.matmul %0, %200, %cst_93 {dimension_numbers = #tpu.dot_dimension_numbers<[1], [0], [0], [1], [0, 0, 1, 1], [], []>} : vector<32x4xbf16>, vector<4x128xbf16>, vector<32x128xf32> -> vector<32x128xf32>
    %202 = vector.broadcast %2 : vector<32x1xf32> to vector<32x128xf32>
    %203 = arith.addf %201, %202 : vector<32x128xf32>
    %cst_94 = arith.constant 0.000000e+00 : f32
    %204 = vector.broadcast %cst_94 : f32 to vector<32x128xf32>
    %205 = arith.maximumf %203, %204 : vector<32x128xf32>
    %206 = arith.truncf %205 : vector<32x128xf32> to vector<32x128xbf16>
    %cst_95 = arith.constant dense<0.000000e+00> : vector<32x128xf32>
    %207 = tpu.matmul %1, %206, %cst_95 {dimension_numbers = #tpu.dot_dimension_numbers<[1], [0], [0], [1], [0, 0, 1, 1], [], []>} : vector<32x32xbf16>, vector<32x128xbf16>, vector<32x128xf32> -> vector<32x128xf32>
    %208 = vector.broadcast %3 : vector<32x1xf32> to vector<32x128xf32>
    %209 = arith.addf %207, %208 : vector<32x128xf32>
    %cst_96 = arith.constant 0.000000e+00 : f32
    %210 = vector.broadcast %cst_96 : f32 to vector<32x128xf32>
    %211 = arith.maximumf %209, %210 : vector<32x128xf32>
    %212 = arith.maximumf %198, %211 : vector<32x128xf32>
    %c15 = arith.constant 15 : index
    %c0_97 = arith.constant 0 : index
    %c0_98 = arith.constant 0 : index
    %213 = vector.load %arg1[%c15, %c0_97, %c0_98] : memref<16x4x128xbf16, #tpu.memory_space<vmem>>, vector<1x4x128xbf16>
    %214 = vector.shape_cast %213 : vector<1x4x128xbf16> to vector<4x128xbf16>
    %cst_99 = arith.constant dense<0.000000e+00> : vector<32x128xf32>
    %215 = tpu.matmul %0, %214, %cst_99 {dimension_numbers = #tpu.dot_dimension_numbers<[1], [0], [0], [1], [0, 0, 1, 1], [], []>} : vector<32x4xbf16>, vector<4x128xbf16>, vector<32x128xf32> -> vector<32x128xf32>
    %216 = vector.broadcast %2 : vector<32x1xf32> to vector<32x128xf32>
    %217 = arith.addf %215, %216 : vector<32x128xf32>
    %cst_100 = arith.constant 0.000000e+00 : f32
    %218 = vector.broadcast %cst_100 : f32 to vector<32x128xf32>
    %219 = arith.maximumf %217, %218 : vector<32x128xf32>
    %220 = arith.truncf %219 : vector<32x128xf32> to vector<32x128xbf16>
    %cst_101 = arith.constant dense<0.000000e+00> : vector<32x128xf32>
    %221 = tpu.matmul %1, %220, %cst_101 {dimension_numbers = #tpu.dot_dimension_numbers<[1], [0], [0], [1], [0, 0, 1, 1], [], []>} : vector<32x32xbf16>, vector<32x128xbf16>, vector<32x128xf32> -> vector<32x128xf32>
    %222 = vector.broadcast %3 : vector<32x1xf32> to vector<32x128xf32>
    %223 = arith.addf %221, %222 : vector<32x128xf32>
    %cst_102 = arith.constant 0.000000e+00 : f32
    %224 = vector.broadcast %cst_102 : f32 to vector<32x128xf32>
    %225 = arith.maximumf %223, %224 : vector<32x128xf32>
    %226 = arith.maximumf %212, %225 : vector<32x128xf32>
    %c0_103 = arith.constant 0 : index
    %c0_104 = arith.constant 0 : index
    %227 = vector.load %arg6[%c0_103, %c0_104] : memref<32x128xf32, #tpu.memory_space<vmem>>, vector<32x128xf32>
    tpu.vector_store %arg6[%c0_103, %c0_104], %226 {strides = array<i32>} : memref<32x128xf32, #tpu.memory_space<vmem>>, vector<32x128xf32>,
    return
  }
  func.func @transform_0(%arg0: i32) -> (i32, i32, i32) {
    %c0_i32 = arith.constant 0 : i32
    %c0_i32_0 = arith.constant 0 : i32
    %c0_i32_1 = arith.constant 0 : i32
    return %c0_i32, %c0_i32_0, %arg0 : i32, i32, i32
  }
  func.func @transform_1(%arg0: i32) -> (i32, i32) {
    %c0_i32 = arith.constant 0 : i32
    %c0_i32_0 = arith.constant 0 : i32
    %c0_i32_1 = arith.constant 0 : i32
    return %c0_i32, %c0_i32_0 : i32, i32
  }
  func.func @transform_2(%arg0: i32) -> (i32, i32) {
    %c0_i32 = arith.constant 0 : i32
    %c0_i32_0 = arith.constant 0 : i32
    %c0_i32_1 = arith.constant 0 : i32
    return %c0_i32, %c0_i32_0 : i32, i32
  }
  func.func @transform_3(%arg0: i32) -> (i32, i32) {
    %c0_i32 = arith.constant 0 : i32
    %c0_i32_0 = arith.constant 0 : i32
    %c0_i32_1 = arith.constant 0 : i32
    return %c0_i32, %c0_i32_0 : i32, i32
  }
  func.func @transform_4(%arg0: i32) -> (i32, i32) {
    %c0_i32 = arith.constant 0 : i32
    %c0_i32_0 = arith.constant 0 : i32
    %c0_i32_1 = arith.constant 0 : i32
    return %c0_i32, %c0_i32_0 : i32, i32
  }
  func.func @transform_5(%arg0: i32) -> (i32, i32) {
    %c0_i32 = arith.constant 0 : i32
    %c0_i32_0 = arith.constant 0 : i32
    return %c0_i32, %arg0 : i32, i32
  }
}

</mosaic_0001>

<llo_original>
// kernel: local_op.1
$region0: #{local_op.1}
  #allocation0 [shape = 'u32[]', space=smem, size = 0x4, offset = 0x4, fixed_abs, tag = 'smem constant byte address 0x4 - core index']
  #allocation1 [shape = 'u32[72,128]{1,0:T(1,128)}', space=vmem, size = 0x9000, scoped, tag = 'internal scratch']
  %s0 = inlined_call_operand.vmem [shape: bf16[16,4,128], index: 0, kind: input, shape index: {}]
  %s1 = inlined_call_operand.vmem [shape: bf16[32,4], index: 1, kind: input, shape index: {}]
  %s2 = inlined_call_operand.vmem [shape: f32[32,1], index: 2, kind: input, shape index: {}]
  %s3 = inlined_call_operand.vmem [shape: bf16[32,32], index: 3, kind: input, shape index: {}]
  %s4 = inlined_call_operand.vmem [shape: f32[32,1], index: 4, kind: input, shape index: {}]
  %s5 = inlined_call_operand.vmem [shape: f32[32,128], index: 5, kind: output, shape index: {}]
  %s6 = sld [smem:[#allocation0]]
  $region30: #{local_op.1} parent=0
    _
  %s8 = ssub.s32 1, %s6
  %s9 = scalar_select 0, %s8, %s6
  // Predicated region
  $region2: #{local_op.1} parent=0 // pred_check
    _
  $region3: #{local_op.1} parent=0 // pred_check_branch
    %11 = sbr.rel (0) target = $region5
  $region4: #{local_op.1} parent=0 // pred_region
    _
  $region5: #{local_op.1} parent=0 // pred_fallthru
    _
  // Predicated region
  $region6: #{local_op.1} parent=0 // pred_check
    _
  $region7: #{local_op.1} parent=0 // pred_check_branch
    %13 = sbr.rel (0) target = $region9
  $region8: #{local_op.1} parent=0 // pred_region
    _
  $region9: #{local_op.1} parent=0 // pred_fallthru
    _
  // Predicated region
  $region10: #{local_op.1} parent=0 // pred_check
    _
  $region11: #{local_op.1} parent=0 // pred_check_branch
    %15 = sbr.rel (0) target = $region13
  $region12: #{local_op.1} parent=0 // pred_region
    _
  $region13: #{local_op.1} parent=0 // pred_fallthru
    _
  // Predicated region
  $region14: #{local_op.1} parent=0 // pred_check
    _
  $region15: #{local_op.1} parent=0 // pred_check_branch
    %17 = sbr.rel (0) target = $region17
  $region16: #{local_op.1} parent=0 // pred_region
    _
  $region17: #{local_op.1} parent=0 // pred_fallthru
    _
  // Predicated region
  $region18: #{local_op.1} parent=0 // pred_check
    _
  $region19: #{local_op.1} parent=0 // pred_check_branch
    %19 = sbr.rel (0) target = $region21
  $region20: #{local_op.1} parent=0 // pred_region
    _
  $region21: #{local_op.1} parent=0 // pred_fallthru
    _
  %v21 = vld [vmem:[%s1] sm:$0xf]
  %v22 = vld [vmem:[%s1 + $0x4] sm:$0xf]
  %v23 = vld [vmem:[%s1 + $0x8] sm:$0xf]
  %v24 = vld [vmem:[%s1 + $0xc] sm:$0xf]
  %v25 = vld [vmem:[%s3] sm:$0xf]
  %v26 = vld [vmem:[%s3 + $0x4] sm:$0xf]
  %v27 = vld [vmem:[%s3 + $0x8] sm:$0xf]
  %v28 = vld [vmem:[%s3 + $0xc] sm:$0xf]
  %v29 = vld [vmem:[%s2] sm:$0xff]
  %v30 = vld [vmem:[%s2 + $0x8] sm:$0xff]
  %v31 = vld [vmem:[%s2 + $0x10] sm:$0xff]
  %v32 = vld [vmem:[%s2 + $0x18] sm:$0xff]
  %v33 = vld [vmem:[%s4] sm:$0xff]
  %v34 = vld [vmem:[%s4 + $0x8] sm:$0xff]
  %v35 = vld [vmem:[%s4 + $0x10] sm:$0xff]
  %v36 = vld [vmem:[%s4 + $0x18] sm:$0xff]
  %v37 = vld [vmem:[%s0] sm:$0x3]
  %39 = vset.pattern.permute.xlu0 0
  %40 = vperm.xlu0 %39, %v29
  %v41 = vpop.permute.xlu0 %40
  %44 = vset.pattern.permute.xlu0 0
  %45 = vperm.xlu0 %44, %v30
  %v46 = vpop.permute.xlu0 %45
  %49 = vset.pattern.permute.xlu0 0
  %50 = vperm.xlu0 %49, %v31
  %v51 = vpop.permute.xlu0 %50
  %54 = vset.pattern.permute.xlu0 0
  %55 = vperm.xlu0 %54, %v32
  %v56 = vpop.permute.xlu0 %55
  %v62 = vunpack.c.l.b16 %v21
  %v63 = vunpack.c.l.b16 %v22
  %v64 = vunpack.c.l.b16 %v23
  %v65 = vunpack.c.l.b16 %v24
  %v66 = vpack.c.b16 %v63, %v62
  %v67 = vpack.c.b16 %v65, %v64
  %vm68 = vcmask 31744
  %v70 = vsel %vm68, %v66, 0
  %v73 = vsel %vm68, %v67, 0
  %vm75 = vcmask 1041408
  %v77 = vsel %vm75, %v37, 0
  %79 = vmatpush.bf16.msra.mxu0 0
  %80 = vmatpush.bf16.msra.mxu0 0
  %81 = vmatpush.bf16.msra.mxu0 0
  %82 = vmatpush.bf16.msra.mxu0 0
  %83 = vmatpush.bf16.msra.mxu0 0
  %84 = vmatpush.bf16.msra.mxu0 0
  %85 = vmatpush.bf16.msra.mxu0 0
  %86 = vmatpush.bf16.msra.mxu0 %v77
  %87 = vmatmul.bf16.gmra.mxu0 %v70
  %v88 = vpop.f32.mrf.mxu0
  %v89 = vadd.f32 %v41, %v88
  %v90 = vpop.f32.mrf.mxu0
  %v91 = vadd.f32 %v46, %v90
  %92 = vmatmul.bf16.gmra.mxu0 %v73
  %v93 = vpop.f32.mrf.mxu0
  %v94 = vadd.f32 %v51, %v93
  %v95 = vpop.f32.mrf.mxu0
  %v96 = vadd.f32 %v56, %v95
  %97 = vdwg.mxu0
  %v98 = vmax.f32 %v89, 0.0
  %v99 = vmax.f32 %v91, 0.0
  %v100 = vmax.f32 %v94, 0.0
  %v101 = vmax.f32 %v96, 0.0
  %v102 = vpack.c.bf16 %v99, %v98
  %v103 = vpack.c.bf16 %v101, %v100
  %105 = vset.pattern.permute.xlu0 0
  %106 = vperm.xlu0 %105, %v33
  %v107 = vpop.permute.xlu0 %106
  %110 = vset.pattern.permute.xlu0 0
  %111 = vperm.xlu0 %110, %v34
  %v112 = vpop.permute.xlu0 %111
  %115 = vset.pattern.permute.xlu0 0
  %116 = vperm.xlu0 %115, %v35
  %v117 = vpop.permute.xlu0 %116
  %120 = vset.pattern.permute.xlu0 0
  %121 = vperm.xlu0 %120, %v36
  %v122 = vpop.permute.xlu0 %121
  %v128 = vunpack.c.l.b16 %v25
  %v129 = vunpack.c.l.b16 %v26
  %v130 = vunpack.c.l.b16 %v27
  %v131 = vunpack.c.l.b16 %v28
  %v132 = vpack.c.b16 %v129, %v128
  %v133 = vpack.c.b16 %v131, %v130
  %vm134 = vcmask 261120
  %v136 = vsel %vm134, %v132, 0
  %v139 = vsel %vm134, %v133, 0
  %141 = vmatpush.bf16.msra.mxu0 0
  %142 = vmatpush.bf16.msra.mxu0 0
  %143 = vmatpush.bf16.msra.mxu0 0
  %144 = vmatpush.bf16.msra.mxu0 0
  %145 = vmatpush.bf16.msra.mxu0 0
  %146 = vmatpush.bf16.msra.mxu0 0
  %147 = vmatpush.bf16.msra.mxu0 %v103
  %148 = vmatpush.bf16.msra.mxu0 %v102
  %149 = vmatmul.bf16.gmra.mxu0 %v136
  %v150 = vpop.f32.mrf.mxu0
  %v151 = vadd.f32 %v107, %v150
  %v152 = vpop.f32.mrf.mxu0
  %v153 = vadd.f32 %v112, %v152
  %154 = vmatmul.bf16.gmra.mxu0 %v139
  %v155 = vpop.f32.mrf.mxu0
  %v156 = vadd.f32 %v117, %v155
  %v157 = vpop.f32.mrf.mxu0
  %v158 = vadd.f32 %v122, %v157
  %159 = vdwg.mxu0
  %v160 = vmax.f32 %v151, 0.0
  %v161 = vmax.f32 %v153, 0.0
  %v162 = vmax.f32 %v156, 0.0
  %v163 = vmax.f32 %v158, 0.0
  %s164 = scalar_lea.vmem %s0, 2
  %v165 = vld [vmem:[%s164] sm:$0x3]
  %v167 = vsel %vm75, %v165, 0
  %169 = vmatpush.bf16.msra.mxu0 0
  %170 = vmatpush.bf16.msra.mxu0 0
  %171 = vmatpush.bf16.msra.mxu0 0
  %172 = vmatpush.bf16.msra.mxu0 0
  %173 = vmatpush.bf16.msra.mxu0 0
  %174 = vmatpush.bf16.msra.mxu0 0
  %175 = vmatpush.bf16.msra.mxu0 0
  %176 = vmatpush.bf16.msra.mxu0 %v167
  %177 = vmatmul.bf16.gmra.mxu0 %v70
  %v178 = vpop.f32.mrf.mxu0
  %v179 = vadd.f32 %v41, %v178
  %v180 = vpop.f32.mrf.mxu0
  %v181 = vadd.f32 %v46, %v180
  %182 = vmatmul.bf16.gmra.mxu0 %v73
  %v183 = vpop.f32.mrf.mxu0
  %v184 = vadd.f32 %v51, %v183
  %v185 = vpop.f32.mrf.mxu0
  %v186 = vadd.f32 %v56, %v185
  %187 = vdwg.mxu0
  %v188 = vmax.f32 %v179, 0.0
  %v189 = vmax.f32 %v181, 0.0
  %v190 = vmax.f32 %v184, 0.0
  %v191 = vmax.f32 %v186, 0.0
  %v192 = vpack.c.bf16 %v189, %v188
  %v193 = vpack.c.bf16 %v191, %v190
  %194 = vmatpush.bf16.msra.mxu0 0
  %195 = vmatpush.bf16.msra.mxu0 0
  %196 = vmatpush.bf16.msra.mxu0 0
  %197 = vmatpush.bf16.msra.mxu0 0
  %198 = vmatpush.bf16.msra.mxu0 0
  %199 = vmatpush.bf16.msra.mxu0 0
  %200 = vmatpush.bf16.msra.mxu0 %v193
  %201 = vmatpush.bf16.msra.mxu0 %v192
  %202 = vmatmul.bf16.gmra.mxu0 %v136
  %v203 = vpop.f32.mrf.mxu0
  %v204 = vadd.f32 %v107, %v203
  %v205 = vpop.f32.mrf.mxu0
  %v206 = vadd.f32 %v112, %v205
  %207 = vmatmul.bf16.gmra.mxu0 %v139
  %v208 = vpop.f32.mrf.mxu0
  %v209 = vadd.f32 %v117, %v208
  %v210 = vpop.f32.mrf.mxu0
  %v211 = vadd.f32 %v122, %v210
  %212 = vdwg.mxu0
  %v213 = vmax.f32 %v204, 0.0
  %v214 = vmax.f32 %v206, 0.0
  %v215 = vmax.f32 %v209, 0.0
  %v216 = vmax.f32 %v211, 0.0
  %v217 = vmax.f32 %v160, %v213
  %v218 = vmax.f32 %v161, %v214
  %v219 = vmax.f32 %v162, %v215
  %v220 = vmax.f32 %v163, %v216
  %s221 = scalar_lea.vmem %s0, 4
  %v222 = vld [vmem:[%s221] sm:$0x3]
  %v224 = vsel %vm75, %v222, 0
  %226 = vmatpush.bf16.msra.mxu0 0
  %227 = vmatpush.bf16.msra.mxu0 0
  %228 = vmatpush.bf16.msra.mxu0 0
  %229 = vmatpush.bf16.msra.mxu0 0
  %230 = vmatpush.bf16.msra.mxu0 0
  %231 = vmatpush.bf16.msra.mxu0 0
  %232 = vmatpush.bf16.msra.mxu0 0
  %233 = vmatpush.bf16.msra.mxu0 %v224
  %234 = vmatmul.bf16.gmra.mxu0 %v70
  %v235 = vpop.f32.mrf.mxu0
  %v236 = vadd.f32 %v41, %v235
  %v237 = vpop.f32.mrf.mxu0
  %v238 = vadd.f32 %v46, %v237
  %239 = vmatmul.bf16.gmra.mxu0 %v73
  %v240 = vpop.f32.mrf.mxu0
  %v241 = vadd.f32 %v51, %v240
  %v242 = vpop.f32.mrf.mxu0
  %v243 = vadd.f32 %v56, %v242
  %244 = vdwg.mxu0
  %v245 = vmax.f32 %v236, 0.0
  %v246 = vmax.f32 %v238, 0.0
  %v247 = vmax.f32 %v241, 0.0
  %v248 = vmax.f32 %v243, 0.0
  %v249 = vpack.c.bf16 %v246, %v245
  %v250 = vpack.c.bf16 %v248, %v247
  %251 = vmatpush.bf16.msra.mxu0 0
  %252 = vmatpush.bf16.msra.mxu0 0
  %253 = vmatpush.bf16.msra.mxu0 0
  %254 = vmatpush.bf16.msra.mxu0 0
  %255 = vmatpush.bf16.msra.mxu0 0
  %256 = vmatpush.bf16.msra.mxu0 0
  %257 = vmatpush.bf16.msra.mxu0 %v250
  %258 = vmatpush.bf16.msra.mxu0 %v249
  %259 = vmatmul.bf16.gmra.mxu0 %v136
  %v260 = vpop.f32.mrf.mxu0
  %v261 = vadd.f32 %v107, %v260
  %v262 = vpop.f32.mrf.mxu0
  %v263 = vadd.f32 %v112, %v262
  %264 = vmatmul.bf16.gmra.mxu0 %v139
  %v265 = vpop.f32.mrf.mxu0
  %v266 = vadd.f32 %v117, %v265
  %v267 = vpop.f32.mrf.mxu0
  %v268 = vadd.f32 %v122, %v267
  %269 = vdwg.mxu0
  %v270 = vmax.f32 %v261, 0.0
  %v271 = vmax.f32 %v263, 0.0
  %v272 = vmax.f32 %v266, 0.0
  %v273 = vmax.f32 %v268, 0.0
  %v274 = vmax.f32 %v217, %v270
  %v275 = vmax.f32 %v218, %v271
  %v276 = vmax.f32 %v219, %v272
  %v277 = vmax.f32 %v220, %v273
  %s278 = scalar_lea.vmem %s0, 6
  %v279 = vld [vmem:[%s278] sm:$0x3]
  %v281 = vsel %vm75, %v279, 0
  %283 = vmatpush.bf16.msra.mxu0 0
  %284 = vmatpush.bf16.msra.mxu0 0
  %285 = vmatpush.bf16.msra.mxu0 0
  %286 = vmatpush.bf16.msra.mxu0 0
  %287 = vmatpush.bf16.msra.mxu0 0
  %288 = vmatpush.bf16.msra.mxu0 0
  %289 = vmatpush.bf16.msra.mxu0 0
  %290 = vmatpush.bf16.msra.mxu0 %v281
  %291 = vmatmul.bf16.gmra.mxu0 %v70
  %v292 = vpop.f32.mrf.mxu0
  %v293 = vadd.f32 %v41, %v292
  %v294 = vpop.f32.mrf.mxu0
  %v295 = vadd.f32 %v46, %v294
  %296 = vmatmul.bf16.gmra.mxu0 %v73
  %v297 = vpop.f32.mrf.mxu0
  %v298 = vadd.f32 %v51, %v297
  %v299 = vpop.f32.mrf.mxu0
  %v300 = vadd.f32 %v56, %v299
  %301 = vdwg.mxu0
  %v302 = vmax.f32 %v293, 0.0
  %v303 = vmax.f32 %v295, 0.0
  %v304 = vmax.f32 %v298, 0.0
  %v305 = vmax.f32 %v300, 0.0
  %v306 = vpack.c.bf16 %v303, %v302
  %v307 = vpack.c.bf16 %v305, %v304
  %308 = vmatpush.bf16.msra.mxu0 0
  %309 = vmatpush.bf16.msra.mxu0 0
  %310 = vmatpush.bf16.msra.mxu0 0
  %311 = vmatpush.bf16.msra.mxu0 0
  %312 = vmatpush.bf16.msra.mxu0 0
  %313 = vmatpush.bf16.msra.mxu0 0
  %314 = vmatpush.bf16.msra.mxu0 %v307
  %315 = vmatpush.bf16.msra.mxu0 %v306
  %316 = vmatmul.bf16.gmra.mxu0 %v136
  %v317 = vpop.f32.mrf.mxu0
  %v318 = vadd.f32 %v107, %v317
  %v319 = vpop.f32.mrf.mxu0
  %v320 = vadd.f32 %v112, %v319
  %321 = vmatmul.bf16.gmra.mxu0 %v139
  %v322 = vpop.f32.mrf.mxu0
  %v323 = vadd.f32 %v117, %v322
  %v324 = vpop.f32.mrf.mxu0
  %v325 = vadd.f32 %v122, %v324
  %326 = vdwg.mxu0
  %v327 = vmax.f32 %v318, 0.0
  %v328 = vmax.f32 %v320, 0.0
  %v329 = vmax.f32 %v323, 0.0
  %v330 = vmax.f32 %v325, 0.0
  %v331 = vmax.f32 %v274, %v327
  %v332 = vmax.f32 %v275, %v328
  %v333 = vmax.f32 %v276, %v329
  %v334 = vmax.f32 %v277, %v330
  %s335 = scalar_lea.vmem %s0, 8
  %v336 = vld [vmem:[%s335] sm:$0x3]
  %v338 = vsel %vm75, %v336, 0
  %340 = vmatpush.bf16.msra.mxu0 0
  %341 = vmatpush.bf16.msra.mxu0 0
  %342 = vmatpush.bf16.msra.mxu0 0
  %343 = vmatpush.bf16.msra.mxu0 0
  %344 = vmatpush.bf16.msra.mxu0 0
  %345 = vmatpush.bf16.msra.mxu0 0
  %346 = vmatpush.bf16.msra.mxu0 0
  %347 = vmatpush.bf16.msra.mxu0 %v338
  %348 = vmatmul.bf16.gmra.mxu0 %v70
  %v349 = vpop.f32.mrf.mxu0
  %v350 = vadd.f32 %v41, %v349
  %v351 = vpop.f32.mrf.mxu0
  %v352 = vadd.f32 %v46, %v351
  %353 = vmatmul.bf16.gmra.mxu0 %v73
  %v354 = vpop.f32.mrf.mxu0
  %v355 = vadd.f32 %v51, %v354
  %v356 = vpop.f32.mrf.mxu0
  %v357 = vadd.f32 %v56, %v356
  %358 = vdwg.mxu0
  %v359 = vmax.f32 %v350, 0.0
  %v360 = vmax.f32 %v352, 0.0
  %v361 = vmax.f32 %v355, 0.0
  %v362 = vmax.f32 %v357, 0.0
  %v363 = vpack.c.bf16 %v360, %v359
  %v364 = vpack.c.bf16 %v362, %v361
  %365 = vmatpush.bf16.msra.mxu0 0
  %366 = vmatpush.bf16.msra.mxu0 0
  %367 = vmatpush.bf16.msra.mxu0 0
  %368 = vmatpush.bf16.msra.mxu0 0
  %369 = vmatpush.bf16.msra.mxu0 0
  %370 = vmatpush.bf16.msra.mxu0 0
  %371 = vmatpush.bf16.msra.mxu0 %v364
  %372 = vmatpush.bf16.msra.mxu0 %v363
  %373 = vmatmul.bf16.gmra.mxu0 %v136
  %v374 = vpop.f32.mrf.mxu0
  %v375 = vadd.f32 %v107, %v374
  %v376 = vpop.f32.mrf.mxu0
  %v377 = vadd.f32 %v112, %v376
  %378 = vmatmul.bf16.gmra.mxu0 %v139
  %v379 = vpop.f32.mrf.mxu0
  %v380 = vadd.f32 %v117, %v379
  %v381 = vpop.f32.mrf.mxu0
  %v382 = vadd.f32 %v122, %v381
  %383 = vdwg.mxu0
  %v384 = vmax.f32 %v375, 0.0
  %v385 = vmax.f32 %v377, 0.0
  %v386 = vmax.f32 %v380, 0.0
  %v387 = vmax.f32 %v382, 0.0
  %v388 = vmax.f32 %v331, %v384
  %v389 = vmax.f32 %v332, %v385
  %v390 = vmax.f32 %v333, %v386
  %v391 = vmax.f32 %v334, %v387
  %s392 = scalar_lea.vmem %s0, 10
  %v393 = vld [vmem:[%s392] sm:$0x3]
  %v395 = vsel %vm75, %v393, 0
  %397 = vmatpush.bf16.msra.mxu0 0
  %398 = vmatpush.bf16.msra.mxu0 0
  %399 = vmatpush.bf16.msra.mxu0 0
  %400 = vmatpush.bf16.msra.mxu0 0
  %401 = vmatpush.bf16.msra.mxu0 0
  %402 = vmatpush.bf16.msra.mxu0 0
  %403 = vmatpush.bf16.msra.mxu0 0
  %404 = vmatpush.bf16.msra.mxu0 %v395
  %405 = vmatmul.bf16.gmra.mxu0 %v70
  %v406 = vpop.f32.mrf.mxu0
  %v407 = vadd.f32 %v41, %v406
  %v408 = vpop.f32.mrf.mxu0
  %v409 = vadd.f32 %v46, %v408
  %410 = vmatmul.bf16.gmra.mxu0 %v73
  %v411 = vpop.f32.mrf.mxu0
  %v412 = vadd.f32 %v51, %v411
  %v413 = vpop.f32.mrf.mxu0
  %v414 = vadd.f32 %v56, %v413
  %415 = vdwg.mxu0
  %v416 = vmax.f32 %v407, 0.0
  %v417 = vmax.f32 %v409, 0.0
  %v418 = vmax.f32 %v412, 0.0
  %v419 = vmax.f32 %v414, 0.0
  %v420 = vpack.c.bf16 %v417, %v416
  %v421 = vpack.c.bf16 %v419, %v418
  %422 = vmatpush.bf16.msra.mxu0 0
  %423 = vmatpush.bf16.msra.mxu0 0
  %424 = vmatpush.bf16.msra.mxu0 0
  %425 = vmatpush.bf16.msra.mxu0 0
  %426 = vmatpush.bf16.msra.mxu0 0
  %427 = vmatpush.bf16.msra.mxu0 0
  %428 = vmatpush.bf16.msra.mxu0 %v421
  %429 = vmatpush.bf16.msra.mxu0 %v420
  %430 = vmatmul.bf16.gmra.mxu0 %v136
  %v431 = vpop.f32.mrf.mxu0
  %v432 = vadd.f32 %v107, %v431
  %v433 = vpop.f32.mrf.mxu0
  %v434 = vadd.f32 %v112, %v433
  %435 = vmatmul.bf16.gmra.mxu0 %v139
  %v436 = vpop.f32.mrf.mxu0
  %v437 = vadd.f32 %v117, %v436
  %v438 = vpop.f32.mrf.mxu0
  %v439 = vadd.f32 %v122, %v438
  %440 = vdwg.mxu0
  %v441 = vmax.f32 %v432, 0.0
  %v442 = vmax.f32 %v434, 0.0
  %v443 = vmax.f32 %v437, 0.0
  %v444 = vmax.f32 %v439, 0.0
  %v445 = vmax.f32 %v388, %v441
  %v446 = vmax.f32 %v389, %v442
  %v447 = vmax.f32 %v390, %v443
  %v448 = vmax.f32 %v391, %v444
  %s449 = scalar_lea.vmem %s0, 12
  %v450 = vld [vmem:[%s449] sm:$0x3]
  %v452 = vsel %vm75, %v450, 0
  %454 = vmatpush.bf16.msra.mxu0 0
  %455 = vmatpush.bf16.msra.mxu0 0
  %456 = vmatpush.bf16.msra.mxu0 0
  %457 = vmatpush.bf16.msra.mxu0 0
  %458 = vmatpush.bf16.msra.mxu0 0
  %459 = vmatpush.bf16.msra.mxu0 0
  %460 = vmatpush.bf16.msra.mxu0 0
  %461 = vmatpush.bf16.msra.mxu0 %v452
  %462 = vmatmul.bf16.gmra.mxu0 %v70
  %v463 = vpop.f32.mrf.mxu0
  %v464 = vadd.f32 %v41, %v463
  %v465 = vpop.f32.mrf.mxu0
  %v466 = vadd.f32 %v46, %v465
  %467 = vmatmul.bf16.gmra.mxu0 %v73
  %v468 = vpop.f32.mrf.mxu0
  %v469 = vadd.f32 %v51, %v468
  %v470 = vpop.f32.mrf.mxu0
  %v471 = vadd.f32 %v56, %v470
  %472 = vdwg.mxu0
  %v473 = vmax.f32 %v464, 0.0
  %v474 = vmax.f32 %v466, 0.0
  %v475 = vmax.f32 %v469, 0.0
  %v476 = vmax.f32 %v471, 0.0
  %v477 = vpack.c.bf16 %v474, %v473
  %v478 = vpack.c.bf16 %v476, %v475
  %479 = vmatpush.bf16.msra.mxu0 0
  %480 = vmatpush.bf16.msra.mxu0 0
  %481 = vmatpush.bf16.msra.mxu0 0
  %482 = vmatpush.bf16.msra.mxu0 0
  %483 = vmatpush.bf16.msra.mxu0 0
  %484 = vmatpush.bf16.msra.mxu0 0
  %485 = vmatpush.bf16.msra.mxu0 %v478
  %486 = vmatpush.bf16.msra.mxu0 %v477
  %487 = vmatmul.bf16.gmra.mxu0 %v136
  %v488 = vpop.f32.mrf.mxu0
  %v489 = vadd.f32 %v107, %v488
  %v490 = vpop.f32.mrf.mxu0
  %v491 = vadd.f32 %v112, %v490
  %492 = vmatmul.bf16.gmra.mxu0 %v139
  %v493 = vpop.f32.mrf.mxu0
  %v494 = vadd.f32 %v117, %v493
  %v495 = vpop.f32.mrf.mxu0
  %v496 = vadd.f32 %v122, %v495
  %497 = vdwg.mxu0
  %v498 = vmax.f32 %v489, 0.0
  %v499 = vmax.f32 %v491, 0.0
  %v500 = vmax.f32 %v494, 0.0
  %v501 = vmax.f32 %v496, 0.0
  %v502 = vmax.f32 %v445, %v498
  %v503 = vmax.f32 %v446, %v499
  %v504 = vmax.f32 %v447, %v500
  %v505 = vmax.f32 %v448, %v501
  %s506 = scalar_lea.vmem %s0, 14
  %v507 = vld [vmem:[%s506] sm:$0x3]
  %v509 = vsel %vm75, %v507, 0
  %511 = vmatpush.bf16.msra.mxu0 0
  %512 = vmatpush.bf16.msra.mxu0 0
  %513 = vmatpush.bf16.msra.mxu0 0
  %514 = vmatpush.bf16.msra.mxu0 0
  %515 = vmatpush.bf16.msra.mxu0 0
  %516 = vmatpush.bf16.msra.mxu0 0
  %517 = vmatpush.bf16.msra.mxu0 0
  %518 = vmatpush.bf16.msra.mxu0 %v509
  %519 = vmatmul.bf16.gmra.mxu0 %v70
  %v520 = vpop.f32.mrf.mxu0
  %v521 = vadd.f32 %v41, %v520
  %v522 = vpop.f32.mrf.mxu0
  %v523 = vadd.f32 %v46, %v522
  %524 = vmatmul.bf16.gmra.mxu0 %v73
  %v525 = vpop.f32.mrf.mxu0
  %v526 = vadd.f32 %v51, %v525
  %v527 = vpop.f32.mrf.mxu0
  %v528 = vadd.f32 %v56, %v527
  %529 = vdwg.mxu0
  %v530 = vmax.f32 %v521, 0.0
  %v531 = vmax.f32 %v523, 0.0
  %v532 = vmax.f32 %v526, 0.0
  %v533 = vmax.f32 %v528, 0.0
  %v534 = vpack.c.bf16 %v531, %v530
  %v535 = vpack.c.bf16 %v533, %v532
  %536 = vmatpush.bf16.msra.mxu0 0
  %537 = vmatpush.bf16.msra.mxu0 0
  %538 = vmatpush.bf16.msra.mxu0 0
  %539 = vmatpush.bf16.msra.mxu0 0
  %540 = vmatpush.bf16.msra.mxu0 0
  %541 = vmatpush.bf16.msra.mxu0 0
  %542 = vmatpush.bf16.msra.mxu0 %v535
  %543 = vmatpush.bf16.msra.mxu0 %v534
  %544 = vmatmul.bf16.gmra.mxu0 %v136
  %v545 = vpop.f32.mrf.mxu0
  %v546 = vadd.f32 %v107, %v545
  %v547 = vpop.f32.mrf.mxu0
  %v548 = vadd.f32 %v112, %v547
  %549 = vmatmul.bf16.gmra.mxu0 %v139
  %v550 = vpop.f32.mrf.mxu0
  %v551 = vadd.f32 %v117, %v550
  %v552 = vpop.f32.mrf.mxu0
  %v553 = vadd.f32 %v122, %v552
  %554 = vdwg.mxu0
  %v555 = vmax.f32 %v546, 0.0
  %v556 = vmax.f32 %v548, 0.0
  %v557 = vmax.f32 %v551, 0.0
  %v558 = vmax.f32 %v553, 0.0
  %v559 = vmax.f32 %v502, %v555
  %v560 = vmax.f32 %v503, %v556
  %v561 = vmax.f32 %v504, %v557
  %v562 = vmax.f32 %v505, %v558
  %s563 = scalar_lea.vmem %s0, 16
  %v564 = vld [vmem:[%s563] sm:$0x3]
  %v566 = vsel %vm75, %v564, 0
  %568 = vmatpush.bf16.msra.mxu0 0
  %569 = vmatpush.bf16.msra.mxu0 0
  %570 = vmatpush.bf16.msra.mxu0 0
  %571 = vmatpush.bf16.msra.mxu0 0
  %572 = vmatpush.bf16.msra.mxu0 0
  %573 = vmatpush.bf16.msra.mxu0 0
  %574 = vmatpush.bf16.msra.mxu0 0
  %575 = vmatpush.bf16.msra.mxu0 %v566
  %576 = vmatmul.bf16.gmra.mxu0 %v70
  %v577 = vpop.f32.mrf.mxu0
  %v578 = vadd.f32 %v41, %v577
  %v579 = vpop.f32.mrf.mxu0
  %v580 = vadd.f32 %v46, %v579
  %581 = vmatmul.bf16.gmra.mxu0 %v73
  %v582 = vpop.f32.mrf.mxu0
  %v583 = vadd.f32 %v51, %v582
  %v584 = vpop.f32.mrf.mxu0
  %v585 = vadd.f32 %v56, %v584
  %586 = vdwg.mxu0
  %v587 = vmax.f32 %v578, 0.0
  %v588 = vmax.f32 %v580, 0.0
  %v589 = vmax.f32 %v583, 0.0
  %v590 = vmax.f32 %v585, 0.0
  %v591 = vpack.c.bf16 %v588, %v587
  %v592 = vpack.c.bf16 %v590, %v589
  %593 = vmatpush.bf16.msra.mxu0 0
  %594 = vmatpush.bf16.msra.mxu0 0
  %595 = vmatpush.bf16.msra.mxu0 0
  %596 = vmatpush.bf16.msra.mxu0 0
  %597 = vmatpush.bf16.msra.mxu0 0
  %598 = vmatpush.bf16.msra.mxu0 0
  %599 = vmatpush.bf16.msra.mxu0 %v592
  %600 = vmatpush.bf16.msra.mxu0 %v591
  %601 = vmatmul.bf16.gmra.mxu0 %v136
  %v602 = vpop.f32.mrf.mxu0
  %v603 = vadd.f32 %v107, %v602
  %v604 = vpop.f32.mrf.mxu0
  %v605 = vadd.f32 %v112, %v604
  %606 = vmatmul.bf16.gmra.mxu0 %v139
  %v607 = vpop.f32.mrf.mxu0
  %v608 = vadd.f32 %v117, %v607
  %v609 = vpop.f32.mrf.mxu0
  %v610 = vadd.f32 %v122, %v609
  %611 = vdwg.mxu0
  %v612 = vmax.f32 %v603, 0.0
  %v613 = vmax.f32 %v605, 0.0
  %v614 = vmax.f32 %v608, 0.0
  %v615 = vmax.f32 %v610, 0.0
  %v616 = vmax.f32 %v559, %v612
  %v617 = vmax.f32 %v560, %v613
  %v618 = vmax.f32 %v561, %v614
  %v619 = vmax.f32 %v562, %v615
  %s620 = scalar_lea.vmem %s0, 18
  %v621 = vld [vmem:[%s620] sm:$0x3]
  %v623 = vsel %vm75, %v621, 0
  %625 = vmatpush.bf16.msra.mxu0 0
  %626 = vmatpush.bf16.msra.mxu0 0
  %627 = vmatpush.bf16.msra.mxu0 0
  %628 = vmatpush.bf16.msra.mxu0 0
  %629 = vmatpush.bf16.msra.mxu0 0
  %630 = vmatpush.bf16.msra.mxu0 0
  %631 = vmatpush.bf16.msra.mxu0 0
  %632 = vmatpush.bf16.msra.mxu0 %v623
  %633 = vmatmul.bf16.gmra.mxu0 %v70
  %v634 = vpop.f32.mrf.mxu0
  %v635 = vadd.f32 %v41, %v634
  %v636 = vpop.f32.mrf.mxu0
  %v637 = vadd.f32 %v46, %v636
  %638 = vmatmul.bf16.gmra.mxu0 %v73
  %v639 = vpop.f32.mrf.mxu0
  %v640 = vadd.f32 %v51, %v639
  %v641 = vpop.f32.mrf.mxu0
  %v642 = vadd.f32 %v56, %v641
  %643 = vdwg.mxu0
  %v644 = vmax.f32 %v635, 0.0
  %v645 = vmax.f32 %v637, 0.0
  %v646 = vmax.f32 %v640, 0.0
  %v647 = vmax.f32 %v642, 0.0
  %v648 = vpack.c.bf16 %v645, %v644
  %v649 = vpack.c.bf16 %v647, %v646
  %650 = vmatpush.bf16.msra.mxu0 0
  %651 = vmatpush.bf16.msra.mxu0 0
  %652 = vmatpush.bf16.msra.mxu0 0
  %653 = vmatpush.bf16.msra.mxu0 0
  %654 = vmatpush.bf16.msra.mxu0 0
  %655 = vmatpush.bf16.msra.mxu0 0
  %656 = vmatpush.bf16.msra.mxu0 %v649
  %657 = vmatpush.bf16.msra.mxu0 %v648
  %658 = vmatmul.bf16.gmra.mxu0 %v136
  %v659 = vpop.f32.mrf.mxu0
  %v660 = vadd.f32 %v107, %v659
  %v661 = vpop.f32.mrf.mxu0
  %v662 = vadd.f32 %v112, %v661
  %663 = vmatmul.bf16.gmra.mxu0 %v139
  %v664 = vpop.f32.mrf.mxu0
  %v665 = vadd.f32 %v117, %v664
  %v666 = vpop.f32.mrf.mxu0
  %v667 = vadd.f32 %v122, %v666
  %668 = vdwg.mxu0
  %v669 = vmax.f32 %v660, 0.0
  %v670 = vmax.f32 %v662, 0.0
  %v671 = vmax.f32 %v665, 0.0
  %v672 = vmax.f32 %v667, 0.0
  %v673 = vmax.f32 %v616, %v669
  %v674 = vmax.f32 %v617, %v670
  %v675 = vmax.f32 %v618, %v671
  %v676 = vmax.f32 %v619, %v672
  %s677 = scalar_lea.vmem %s0, 20
  %v678 = vld [vmem:[%s677] sm:$0x3]
  %v680 = vsel %vm75, %v678, 0
  %682 = vmatpush.bf16.msra.mxu0 0
  %683 = vmatpush.bf16.msra.mxu0 0
  %684 = vmatpush.bf16.msra.mxu0 0
  %685 = vmatpush.bf16.msra.mxu0 0
  %686 = vmatpush.bf16.msra.mxu0 0
  %687 = vmatpush.bf16.msra.mxu0 0
  %688 = vmatpush.bf16.msra.mxu0 0
  %689 = vmatpush.bf16.msra.mxu0 %v680
  %690 = vmatmul.bf16.gmra.mxu0 %v70
  %v691 = vpop.f32.mrf.mxu0
  %v692 = vadd.f32 %v41, %v691
  %v693 = vpop.f32.mrf.mxu0
  %v694 = vadd.f32 %v46, %v693
  %695 = vmatmul.bf16.gmra.mxu0 %v73
  %v696 = vpop.f32.mrf.mxu0
  %v697 = vadd.f32 %v51, %v696
  %v698 = vpop.f32.mrf.mxu0
  %v699 = vadd.f32 %v56, %v698
  %700 = vdwg.mxu0
  %v701 = vmax.f32 %v692, 0.0
  %v702 = vmax.f32 %v694, 0.0
  %v703 = vmax.f32 %v697, 0.0
  %v704 = vmax.f32 %v699, 0.0
  %v705 = vpack.c.bf16 %v702, %v701
  %v706 = vpack.c.bf16 %v704, %v703
  %707 = vmatpush.bf16.msra.mxu0 0
  %708 = vmatpush.bf16.msra.mxu0 0
  %709 = vmatpush.bf16.msra.mxu0 0
  %710 = vmatpush.bf16.msra.mxu0 0
  %711 = vmatpush.bf16.msra.mxu0 0
  %712 = vmatpush.bf16.msra.mxu0 0
  %713 = vmatpush.bf16.msra.mxu0 %v706
  %714 = vmatpush.bf16.msra.mxu0 %v705
  %715 = vmatmul.bf16.gmra.mxu0 %v136
  %v716 = vpop.f32.mrf.mxu0
  %v717 = vadd.f32 %v107, %v716
  %v718 = vpop.f32.mrf.mxu0
  %v719 = vadd.f32 %v112, %v718
  %720 = vmatmul.bf16.gmra.mxu0 %v139
  %v721 = vpop.f32.mrf.mxu0
  %v722 = vadd.f32 %v117, %v721
  %v723 = vpop.f32.mrf.mxu0
  %v724 = vadd.f32 %v122, %v723
  %725 = vdwg.mxu0
  %v726 = vmax.f32 %v717, 0.0
  %v727 = vmax.f32 %v719, 0.0
  %v728 = vmax.f32 %v722, 0.0
  %v729 = vmax.f32 %v724, 0.0
  %v730 = vmax.f32 %v673, %v726
  %v731 = vmax.f32 %v674, %v727
  %v732 = vmax.f32 %v675, %v728
  %v733 = vmax.f32 %v676, %v729
  %s734 = scalar_lea.vmem %s0, 22
  %v735 = vld [vmem:[%s734] sm:$0x3]
  %v737 = vsel %vm75, %v735, 0
  %739 = vmatpush.bf16.msra.mxu0 0
  %740 = vmatpush.bf16.msra.mxu0 0
  %741 = vmatpush.bf16.msra.mxu0 0
  %742 = vmatpush.bf16.msra.mxu0 0
  %743 = vmatpush.bf16.msra.mxu0 0
  %744 = vmatpush.bf16.msra.mxu0 0
  %745 = vmatpush.bf16.msra.mxu0 0
  %746 = vmatpush.bf16.msra.mxu0 %v737
  %747 = vmatmul.bf16.gmra.mxu0 %v70
  %v748 = vpop.f32.mrf.mxu0
  %v749 = vadd.f32 %v41, %v748
  %v750 = vpop.f32.mrf.mxu0
  %v751 = vadd.f32 %v46, %v750
  %752 = vmatmul.bf16.gmra.mxu0 %v73
  %v753 = vpop.f32.mrf.mxu0
  %v754 = vadd.f32 %v51, %v753
  %v755 = vpop.f32.mrf.mxu0
  %v756 = vadd.f32 %v56, %v755
  %757 = vdwg.mxu0
  %v758 = vmax.f32 %v749, 0.0
  %v759 = vmax.f32 %v751, 0.0
  %v760 = vmax.f32 %v754, 0.0
  %v761 = vmax.f32 %v756, 0.0
  %v762 = vpack.c.bf16 %v759, %v758
  %v763 = vpack.c.bf16 %v761, %v760
  %764 = vmatpush.bf16.msra.mxu0 0
  %765 = vmatpush.bf16.msra.mxu0 0
  %766 = vmatpush.bf16.msra.mxu0 0
  %767 = vmatpush.bf16.msra.mxu0 0
  %768 = vmatpush.bf16.msra.mxu0 0
  %769 = vmatpush.bf16.msra.mxu0 0
  %770 = vmatpush.bf16.msra.mxu0 %v763
  %771 = vmatpush.bf16.msra.mxu0 %v762
  %772 = vmatmul.bf16.gmra.mxu0 %v136
  %v773 = vpop.f32.mrf.mxu0
  %v774 = vadd.f32 %v107, %v773
  %v775 = vpop.f32.mrf.mxu0
  %v776 = vadd.f32 %v112, %v775
  %777 = vmatmul.bf16.gmra.mxu0 %v139
  %v778 = vpop.f32.mrf.mxu0
  %v779 = vadd.f32 %v117, %v778
  %v780 = vpop.f32.mrf.mxu0
  %v781 = vadd.f32 %v122, %v780
  %782 = vdwg.mxu0
  %v783 = vmax.f32 %v774, 0.0
  %v784 = vmax.f32 %v776, 0.0
  %v785 = vmax.f32 %v779, 0.0
  %v786 = vmax.f32 %v781, 0.0
  %v787 = vmax.f32 %v730, %v783
  %v788 = vmax.f32 %v731, %v784
  %v789 = vmax.f32 %v732, %v785
  %v790 = vmax.f32 %v733, %v786
  %s791 = scalar_lea.vmem %s0, 24
  %v792 = vld [vmem:[%s791] sm:$0x3]
  %v794 = vsel %vm75, %v792, 0
  %796 = vmatpush.bf16.msra.mxu0 0
  %797 = vmatpush.bf16.msra.mxu0 0
  %798 = vmatpush.bf16.msra.mxu0 0
  %799 = vmatpush.bf16.msra.mxu0 0
  %800 = vmatpush.bf16.msra.mxu0 0
  %801 = vmatpush.bf16.msra.mxu0 0
  %802 = vmatpush.bf16.msra.mxu0 0
  %803 = vmatpush.bf16.msra.mxu0 %v794
  %804 = vmatmul.bf16.gmra.mxu0 %v70
  %v805 = vpop.f32.mrf.mxu0
  %v806 = vadd.f32 %v41, %v805
  %v807 = vpop.f32.mrf.mxu0
  %v808 = vadd.f32 %v46, %v807
  %809 = vmatmul.bf16.gmra.mxu0 %v73
  %v810 = vpop.f32.mrf.mxu0
  %v811 = vadd.f32 %v51, %v810
  %v812 = vpop.f32.mrf.mxu0
  %v813 = vadd.f32 %v56, %v812
  %814 = vdwg.mxu0
  %v815 = vmax.f32 %v806, 0.0
  %v816 = vmax.f32 %v808, 0.0
  %v817 = vmax.f32 %v811, 0.0
  %v818 = vmax.f32 %v813, 0.0
  %v819 = vpack.c.bf16 %v816, %v815
  %v820 = vpack.c.bf16 %v818, %v817
  %821 = vmatpush.bf16.msra.mxu0 0
  %822 = vmatpush.bf16.msra.mxu0 0
  %823 = vmatpush.bf16.msra.mxu0 0
  %824 = vmatpush.bf16.msra.mxu0 0
  %825 = vmatpush.bf16.msra.mxu0 0
  %826 = vmatpush.bf16.msra.mxu0 0
  %827 = vmatpush.bf16.msra.mxu0 %v820
  %828 = vmatpush.bf16.msra.mxu0 %v819
  %829 = vmatmul.bf16.gmra.mxu0 %v136
  %v830 = vpop.f32.mrf.mxu0
  %v831 = vadd.f32 %v107, %v830
  %v832 = vpop.f32.mrf.mxu0
  %v833 = vadd.f32 %v112, %v832
  %834 = vmatmul.bf16.gmra.mxu0 %v139
  %v835 = vpop.f32.mrf.mxu0
  %v836 = vadd.f32 %v117, %v835
  %v837 = vpop.f32.mrf.mxu0
  %v838 = vadd.f32 %v122, %v837
  %839 = vdwg.mxu0
  %v840 = vmax.f32 %v831, 0.0
  %v841 = vmax.f32 %v833, 0.0
  %v842 = vmax.f32 %v836, 0.0
  %v843 = vmax.f32 %v838, 0.0
  %v844 = vmax.f32 %v787, %v840
  %v845 = vmax.f32 %v788, %v841
  %v846 = vmax.f32 %v789, %v842
  %v847 = vmax.f32 %v790, %v843
  %s848 = scalar_lea.vmem %s0, 26
  %v849 = vld [vmem:[%s848] sm:$0x3]
  %v851 = vsel %vm75, %v849, 0
  %853 = vmatpush.bf16.msra.mxu0 0
  %854 = vmatpush.bf16.msra.mxu0 0
  %855 = vmatpush.bf16.msra.mxu0 0
  %856 = vmatpush.bf16.msra.mxu0 0
  %857 = vmatpush.bf16.msra.mxu0 0
  %858 = vmatpush.bf16.msra.mxu0 0
  %859 = vmatpush.bf16.msra.mxu0 0
  %860 = vmatpush.bf16.msra.mxu0 %v851
  %861 = vmatmul.bf16.gmra.mxu0 %v70
  %v862 = vpop.f32.mrf.mxu0
  %v863 = vadd.f32 %v41, %v862
  %v864 = vpop.f32.mrf.mxu0
  %v865 = vadd.f32 %v46, %v864
  %866 = vmatmul.bf16.gmra.mxu0 %v73
  %v867 = vpop.f32.mrf.mxu0
  %v868 = vadd.f32 %v51, %v867
  %v869 = vpop.f32.mrf.mxu0
  %v870 = vadd.f32 %v56, %v869
  %871 = vdwg.mxu0
  %v872 = vmax.f32 %v863, 0.0
  %v873 = vmax.f32 %v865, 0.0
  %v874 = vmax.f32 %v868, 0.0
  %v875 = vmax.f32 %v870, 0.0
  %v876 = vpack.c.bf16 %v873, %v872
  %v877 = vpack.c.bf16 %v875, %v874
  %878 = vmatpush.bf16.msra.mxu0 0
  %879 = vmatpush.bf16.msra.mxu0 0
  %880 = vmatpush.bf16.msra.mxu0 0
  %881 = vmatpush.bf16.msra.mxu0 0
  %882 = vmatpush.bf16.msra.mxu0 0
  %883 = vmatpush.bf16.msra.mxu0 0
  %884 = vmatpush.bf16.msra.mxu0 %v877
  %885 = vmatpush.bf16.msra.mxu0 %v876
  %886 = vmatmul.bf16.gmra.mxu0 %v136
  %v887 = vpop.f32.mrf.mxu0
  %v888 = vadd.f32 %v107, %v887
  %v889 = vpop.f32.mrf.mxu0
  %v890 = vadd.f32 %v112, %v889
  %891 = vmatmul.bf16.gmra.mxu0 %v139
  %v892 = vpop.f32.mrf.mxu0
  %v893 = vadd.f32 %v117, %v892
  %v894 = vpop.f32.mrf.mxu0
  %v895 = vadd.f32 %v122, %v894
  %896 = vdwg.mxu0
  %v897 = vmax.f32 %v888, 0.0
  %v898 = vmax.f32 %v890, 0.0
  %v899 = vmax.f32 %v893, 0.0
  %v900 = vmax.f32 %v895, 0.0
  %v901 = vmax.f32 %v844, %v897
  %v902 = vmax.f32 %v845, %v898
  %v903 = vmax.f32 %v846, %v899
  %v904 = vmax.f32 %v847, %v900
  %s905 = scalar_lea.vmem %s0, 28
  %v906 = vld [vmem:[%s905] sm:$0x3]
  %v908 = vsel %vm75, %v906, 0
  %910 = vmatpush.bf16.msra.mxu0 0
  %911 = vmatpush.bf16.msra.mxu0 0
  %912 = vmatpush.bf16.msra.mxu0 0
  %913 = vmatpush.bf16.msra.mxu0 0
  %914 = vmatpush.bf16.msra.mxu0 0
  %915 = vmatpush.bf16.msra.mxu0 0
  %916 = vmatpush.bf16.msra.mxu0 0
  %917 = vmatpush.bf16.msra.mxu0 %v908
  %918 = vmatmul.bf16.gmra.mxu0 %v70
  %v919 = vpop.f32.mrf.mxu0
  %v920 = vadd.f32 %v41, %v919
  %v921 = vpop.f32.mrf.mxu0
  %v922 = vadd.f32 %v46, %v921
  %923 = vmatmul.bf16.gmra.mxu0 %v73
  %v924 = vpop.f32.mrf.mxu0
  %v925 = vadd.f32 %v51, %v924
  %v926 = vpop.f32.mrf.mxu0
  %v927 = vadd.f32 %v56, %v926
  %928 = vdwg.mxu0
  %v929 = vmax.f32 %v920, 0.0
  %v930 = vmax.f32 %v922, 0.0
  %v931 = vmax.f32 %v925, 0.0
  %v932 = vmax.f32 %v927, 0.0
  %v933 = vpack.c.bf16 %v930, %v929
  %v934 = vpack.c.bf16 %v932, %v931
  %935 = vmatpush.bf16.msra.mxu0 0
  %936 = vmatpush.bf16.msra.mxu0 0
  %937 = vmatpush.bf16.msra.mxu0 0
  %938 = vmatpush.bf16.msra.mxu0 0
  %939 = vmatpush.bf16.msra.mxu0 0
  %940 = vmatpush.bf16.msra.mxu0 0
  %941 = vmatpush.bf16.msra.mxu0 %v934
  %942 = vmatpush.bf16.msra.mxu0 %v933
  %943 = vmatmul.bf16.gmra.mxu0 %v136
  %v944 = vpop.f32.mrf.mxu0
  %v945 = vadd.f32 %v107, %v944
  %v946 = vpop.f32.mrf.mxu0
  %v947 = vadd.f32 %v112, %v946
  %948 = vmatmul.bf16.gmra.mxu0 %v139
  %v949 = vpop.f32.mrf.mxu0
  %v950 = vadd.f32 %v117, %v949
  %v951 = vpop.f32.mrf.mxu0
  %v952 = vadd.f32 %v122, %v951
  %953 = vdwg.mxu0
  %v954 = vmax.f32 %v945, 0.0
  %v955 = vmax.f32 %v947, 0.0
  %v956 = vmax.f32 %v950, 0.0
  %v957 = vmax.f32 %v952, 0.0
  %v958 = vmax.f32 %v901, %v954
  %v959 = vmax.f32 %v902, %v955
  %v960 = vmax.f32 %v903, %v956
  %v961 = vmax.f32 %v904, %v957
  %s962 = scalar_lea.vmem %s0, 30
  %v963 = vld [vmem:[%s962] sm:$0x3]
  %v965 = vsel %vm75, %v963, 0
  %967 = vmatpush.bf16.msra.mxu0 0
  %968 = vmatpush.bf16.msra.mxu0 0
  %969 = vmatpush.bf16.msra.mxu0 0
  %970 = vmatpush.bf16.msra.mxu0 0
  %971 = vmatpush.bf16.msra.mxu0 0
  %972 = vmatpush.bf16.msra.mxu0 0
  %973 = vmatpush.bf16.msra.mxu0 0
  %974 = vmatpush.bf16.msra.mxu0 %v965
  %975 = vmatmul.bf16.gmra.mxu0 %v70
  %v976 = vpop.f32.mrf.mxu0
  %v977 = vadd.f32 %v41, %v976
  %v978 = vpop.f32.mrf.mxu0
  %v979 = vadd.f32 %v46, %v978
  %980 = vmatmul.bf16.gmra.mxu0 %v73
  %v981 = vpop.f32.mrf.mxu0
  %v982 = vadd.f32 %v51, %v981
  %v983 = vpop.f32.mrf.mxu0
  %v984 = vadd.f32 %v56, %v983
  %985 = vdwg.mxu0
  %v986 = vmax.f32 %v977, 0.0
  %v987 = vmax.f32 %v979, 0.0
  %v988 = vmax.f32 %v982, 0.0
  %v989 = vmax.f32 %v984, 0.0
  %v990 = vpack.c.bf16 %v987, %v986
  %v991 = vpack.c.bf16 %v989, %v988
  %992 = vmatpush.bf16.msra.mxu0 0
  %993 = vmatpush.bf16.msra.mxu0 0
  %994 = vmatpush.bf16.msra.mxu0 0
  %995 = vmatpush.bf16.msra.mxu0 0
  %996 = vmatpush.bf16.msra.mxu0 0
  %997 = vmatpush.bf16.msra.mxu0 0
  %998 = vmatpush.bf16.msra.mxu0 %v991
  %999 = vmatpush.bf16.msra.mxu0 %v990
  %1000 = vmatmul.bf16.gmra.mxu0 %v136
  %v1001 = vpop.f32.mrf.mxu0
  %v1002 = vadd.f32 %v107, %v1001
  %v1003 = vpop.f32.mrf.mxu0
  %v1004 = vadd.f32 %v112, %v1003
  %1005 = vmatmul.bf16.gmra.mxu0 %v139
  %v1006 = vpop.f32.mrf.mxu0
  %v1007 = vadd.f32 %v117, %v1006
  %v1008 = vpop.f32.mrf.mxu0
  %v1009 = vadd.f32 %v122, %v1008
  %1010 = vdwg.mxu0
  %v1011 = vmax.f32 %v1002, 0.0
  %v1012 = vmax.f32 %v1004, 0.0
  %v1013 = vmax.f32 %v1007, 0.0
  %v1014 = vmax.f32 %v1009, 0.0
  %v1015 = vmax.f32 %v958, %v1011
  %v1016 = vmax.f32 %v959, %v1012
  %v1017 = vmax.f32 %v960, %v1013
  %v1018 = vmax.f32 %v961, %v1014
  %1019 = vst [vmem:[%s5] sm:$0xff] %v1015
  %1020 = vst [vmem:[%s5 + $0x8] sm:$0xff] %v1016
  %1021 = vst [vmem:[%s5 + $0x10] sm:$0xff] %v1017
  %1022 = vst [vmem:[%s5 + $0x18] sm:$0xff] %v1018
  // Predicated region
  $region22: #{local_op.1} parent=0 // pred_check
    _
  $region23: #{local_op.1} parent=0 // pred_check_branch
    %1024 = sbr.rel (0) target = $region25
  $region24: #{local_op.1} parent=0 // pred_region
    _
  $region25: #{local_op.1} parent=0 // pred_fallthru
    _
  // Predicated region
  $region26: #{local_op.1} parent=0 // pred_check
    _
  $region27: #{local_op.1} parent=0 // pred_check_branch
    %1026 = sbr.rel (0) target = $region29
  $region28: #{local_op.1} parent=0 // pred_region
    _
  $region29: #{local_op.1} parent=0 // pred_fallthru
    _

</llo_original>
